<compile_context>
chip_gen: v6e
topology: v6e:2x2x1
jax: 0.10.0
libtpu: 0.0.40
codegen_flags: <defaults>
</compile_context>

<pallas_src>
import math

import jax
import jax.numpy as jnp
from jax import lax
from jax.experimental import pallas as pl
from jax.experimental.pallas import tpu as pltpu  # noqa: F401  (kept for parity)

# ---- config (small, consistent with the module) ----
BATCH = 2
SEQ = 8
HIDDEN = 32
NUM_HEADS = 4
HEAD_DIM = HIDDEN // NUM_HEADS
LN_EPS = 1e-12  # BERT-style layer_norm_eps

BS = BATCH * SEQ  # 16 rows: all tokens of all batch elements


def iqm_attention_kernel(x_ref, w_ref, p_ref, o_ref):
    """Single grid step over the whole problem.

    x_ref : (BS, H)   flattened (batch*seq, hidden)
    w_ref : (H, 4H)   [Wq/sqrt(d) | Wk | Wv | Wo]  (lane-dense 128-wide slab)
    p_ref : (2, 4H)   row0 = [bq/sqrt(d) | bk | bv | bo]
                      row1 = [gamma | beta | 0 | 0]
    o_ref : (BS, H)
    """
    x = x_ref[...].astype(jnp.float32)                          # (16, 32)
    w = w_ref[...]                                               # (32, 128)
    p = p_ref[...]                                               # (2, 128)

    # One MXU push produces scaled-Q | K | V for all tokens (the trailing Wo
    # lanes ride along on the 128-wide operand and are never read).
    proj = jnp.dot(x, w, preferred_element_type=jnp.float32) + p[0:1, :]  # (16,128)

    # Tiny (16,16) additive batch-block mask, built once, shared by all heads.
    # (r ^ c) < SEQ  <=>  r // SEQ == c // SEQ  since SEQ is a power of two.
    r = lax.broadcasted_iota(jnp.int32, (BS, BS), 0)
    c = lax.broadcasted_iota(jnp.int32, (BS, BS), 1)
    bias = jnp.where((r ^ c) < SEQ, 0.0, -1e30).astype(jnp.float32)

    # Residual + output-projection bias; per-head context is accumulated
    # directly into the output projection (no context concatenation).
    acc = x + p[0:1, 3 * HIDDEN:4 * HIDDEN]                      # (16, 32)

    for h in range(NUM_HEADS):                                   # 4 tiny, unrolled
        lo = h * HEAD_DIM
        qh = proj[:, 0 * HIDDEN + lo: 0 * HIDDEN + lo + HEAD_DIM]   # (16, 8)
        kh = proj[:, 1 * HIDDEN + lo: 1 * HIDDEN + lo + HEAD_DIM]   # (16, 8)
        vh = proj[:, 2 * HIDDEN + lo: 2 * HIDDEN + lo + HEAD_DIM]   # (16, 8)

        # Scores for this head over all (batch, token) rows; cross-batch
        # entries are killed by the additive block mask.
        s = lax.dot_general(qh, kh, (((1,), (1,)), ((), ())),
                            preferred_element_type=jnp.float32) + bias  # (16,16)
        m = jnp.max(s, axis=-1, keepdims=True)
        e = jnp.exp(s - m)
        den = jnp.sum(e, axis=-1, keepdims=True)
        ctx = jnp.dot(e, vh, preferred_element_type=jnp.float32)        # (16, 8)
        ctx = ctx * pl.reciprocal(den, approx=False)

        # Accumulate this head's slice of the output projection.
        wo_h = w[lo: lo + HEAD_DIM, 3 * HIDDEN:4 * HIDDEN]              # (8, 32)
        acc = acc + jnp.dot(ctx, wo_h, preferred_element_type=jnp.float32)

    # --- LayerNorm(out + residual) ---
    mu = jnp.mean(acc, axis=-1, keepdims=True)
    var = jnp.mean((acc - mu) ** 2, axis=-1, keepdims=True)      # biased variance
    y = (acc - mu) * lax.rsqrt(var + LN_EPS)
    gamma = p[1:2, 0:HIDDEN]
    beta = p[1:2, HIDDEN:2 * HIDDEN]
    o_ref[...] = (y * gamma + beta).astype(o_ref.dtype)


def pack_iqm_params(wq, bq, wk, bk, wv, bv, wo, bo, gamma, beta):
    """One-time parameter packing. Run at parameter-load time, NOT per call.

    Folds the 1/sqrt(head_dim) score scale into Wq/bq and packs everything
    into a lane-dense (H, 4H) weight slab + a (2, 4H) bias/LN slab.
    """
    s = 1.0 / math.sqrt(HEAD_DIM)
    w_all = jnp.concatenate([wq * s, wk, wv, wo], axis=1)                 # (32, 128)
    p_all = jnp.concatenate([
        jnp.concatenate([bq * s, bk, bv, bo], axis=1),                    # (1, 128)
        jnp.concatenate([gamma, beta, jnp.zeros((1, 2 * HIDDEN), wq.dtype)],
                        axis=1),                                          # (1, 128)
    ], axis=0)                                                            # (2, 128)
    return jax.device_put(w_all), jax.device_put(p_all)


@jax.jit
def iqm_attention(x, w_all, p_all):
    """Per-call path: takes the pre-packed slabs, no per-call packing ops."""
    B, S, H = x.shape
    x2 = x.reshape(B * S, H)
    out2 = pl.pallas_call(
        iqm_attention_kernel,
        out_shape=jax.ShapeDtypeStruct((B * S, H), x.dtype),
        grid=(1,),
        in_specs=[
            pl.BlockSpec((B * S, H), lambda i: (0, 0)),
            pl.BlockSpec((HIDDEN, 4 * HIDDEN), lambda i: (0, 0)),
            pl.BlockSpec((2, 4 * HIDDEN), lambda i: (0, 0)),
        ],
        out_specs=pl.BlockSpec((B * S, H), lambda i: (0, 0)),
    )(x2, w_all, p_all)
    return out2.reshape(B, S, H)


def reference(x, wq, bq, wk, bk, wv, bv, wo, bo, gamma, beta):
    # Pure-JAX reference for correctness check (matches the torch module in
    # eval mode: self-attention + SelfOutput with residual LayerNorm).
    q = x @ wq + bq[0]
    k = x @ wk + bk[0]
    v = x @ wv + bv[0]
    B, S, H = x.shape

    def split(t):  # (B,S,H) -> (B,nh,S,d)
        return t.reshape(B, S, NUM_HEADS, HEAD_DIM).transpose(0, 2, 1, 3)

    qh, kh, vh = split(q), split(k), split(v)
    scores = jnp.einsum('bhld,bhrd->bhlr', qh, kh) / math.sqrt(HEAD_DIM)
    probs = jax.nn.softmax(scores, axis=-1)
    ctx = jnp.einsum('bhlr,bhrd->bhld', probs, vh)
    ctx = ctx.transpose(0, 2, 1, 3).reshape(B, S, H)
    out = ctx @ wo + bo[0]
    y = out + x
    mu = jnp.mean(y, -1, keepdims=True)
    var = jnp.mean((y - mu) ** 2, -1, keepdims=True)
    return (y - mu) / jnp.sqrt(var + LN_EPS) * gamma[0] + beta[0]


if __name__ == "__main__":
    key = jax.random.PRNGKey(0)
    ks = jax.random.split(key, 10)
    scale = 0.02

    x = jax.random.normal(ks[0], (BATCH, SEQ, HIDDEN), dtype=jnp.float32)

    # Linear weights stored as (in, out) (transposed vs. torch); biases as (1, H).
    wq = scale * jax.random.normal(ks[1], (HIDDEN, HIDDEN), dtype=jnp.float32)
    wk = scale * jax.random.normal(ks[2], (HIDDEN, HIDDEN), dtype=jnp.float32)
    wv = scale * jax.random.normal(ks[3], (HIDDEN, HIDDEN), dtype=jnp.float32)
    wo = scale * jax.random.normal(ks[4], (HIDDEN, HIDDEN), dtype=jnp.float32)
    bq = scale * jax.random.normal(ks[5], (1, HIDDEN), dtype=jnp.float32)
    bk = scale * jax.random.normal(ks[6], (1, HIDDEN), dtype=jnp.float32)
    bv = scale * jax.random.normal(ks[7], (1, HIDDEN), dtype=jnp.float32)
    bo = scale * jax.random.normal(ks[8], (1, HIDDEN), dtype=jnp.float32)
    gamma = jnp.ones((1, HIDDEN), dtype=jnp.float32)
    beta = jnp.zeros((1, HIDDEN), dtype=jnp.float32)

    # One-time packing (parameter-load time), then the hot per-call path.
    w_all, p_all = pack_iqm_params(wq, bq, wk, bk, wv, bv, wo, bo, gamma, beta)

    out = iqm_attention(x, w_all, p_all)
    out = jax.block_until_ready(out)

    ref = reference(x, wq, bq, wk, bk, wv, bv, wo, bo, gamma, beta)
    assert out.shape == (BATCH, SEQ, HIDDEN)
    assert jnp.allclose(out, ref, atol=1e-4, rtol=1e-4), "mismatch vs JAX reference"

    print("KERNEL_OK")
</pallas_src>

<mosaic_0001>
module attributes {stable_mosaic.version = 11 : i64} {
  func.func @iqm_attention_kernel(%arg0: i32, %arg1: memref<16x32xf32, #tpu.memory_space<vmem>>, %arg2: memref<32x128xf32, #tpu.memory_space<vmem>>, %arg3: memref<2x128xf32, #tpu.memory_space<vmem>>, %arg4: memref<16x32xf32, #tpu.memory_space<vmem>>) attributes {dimension_semantics = [#tpu.dimension_semantics<arbitrary>], iteration_bounds = array<i64: 1>, scalar_prefetch = 0 : i64, scratch_operands = 0 : i64, tpu.core_type = #tpu.core_type<tc>, window_params = [{pipeline_mode = #tpu.pipeline_mode<synchronous>, transform_indices = @transform_0, window_bounds = array<i64: 16, 32>}, {pipeline_mode = #tpu.pipeline_mode<synchronous>, transform_indices = @transform_1, window_bounds = array<i64: 32, 128>}, {pipeline_mode = #tpu.pipeline_mode<synchronous>, transform_indices = @transform_2, window_bounds = array<i64: 2, 128>}, {pipeline_mode = #tpu.pipeline_mode<synchronous>, transform_indices = @transform_3, window_bounds = array<i64: 16, 32>}]} {
    %c0 = arith.constant 0 : index
    %c0_0 = arith.constant 0 : index
    %0 = vector.load %arg1[%c0, %c0_0] : memref<16x32xf32, #tpu.memory_space<vmem>>, vector<16x32xf32>
    %c0_1 = arith.constant 0 : index
    %c0_2 = arith.constant 0 : index
    %1 = vector.load %arg2[%c0_1, %c0_2] : memref<32x128xf32, #tpu.memory_space<vmem>>, vector<32x128xf32>
    %c0_3 = arith.constant 0 : index
    %c0_4 = arith.constant 0 : index
    %2 = vector.load %arg3[%c0_3, %c0_4] : memref<2x128xf32, #tpu.memory_space<vmem>>, vector<2x128xf32>
    %cst = arith.constant dense<0.000000e+00> : vector<16x128xf32>
    %3 = tpu.matmul %0, %1, %cst {dimension_numbers = #tpu.dot_dimension_numbers<[1], [0], [0], [1], [0, 0, 1, 1], [], []>} : vector<16x32xf32>, vector<32x128xf32>, vector<16x128xf32> -> vector<16x128xf32>
    %4 = vector.extract_strided_slice %2 {offsets = [0, 0], sizes = [1, 128], strides = [1, 1]} : vector<2x128xf32> to vector<1x128xf32>
    %5 = vector.broadcast %4 : vector<1x128xf32> to vector<16x128xf32>
    %6 = arith.addf %3, %5 : vector<16x128xf32>
    %7 = tpu.iota {dimensions = array<i32: 0>} : vector<16x16xi32>
    %8 = tpu.iota {dimensions = array<i32: 1>} : vector<16x16xi32>
    %9 = arith.xori %7, %8 : vector<16x16xi32>
    %c8_i32 = arith.constant 8 : i32
    %10 = vector.broadcast %c8_i32 : i32 to vector<16x16xi32>
    %11 = arith.cmpi slt, %9, %10 : vector<16x16xi32>
    %cst_5 = arith.constant 0.000000e+00 : f32
    %cst_6 = arith.constant -1.000000e+30 : f32
    %12 = vector.broadcast %cst_5 : f32 to vector<16x16xf32>
    %13 = vector.broadcast %cst_6 : f32 to vector<16x16xf32>
    %14 = arith.select %11, %12, %13 : vector<16x16xi1>, vector<16x16xf32>
    %15 = vector.extract_strided_slice %2 {offsets = [0, 96], sizes = [1, 32], strides = [1, 1]} : vector<2x128xf32> to vector<1x32xf32>
    %16 = vector.broadcast %15 : vector<1x32xf32> to vector<16x32xf32>
    %17 = arith.addf %0, %16 : vector<16x32xf32>
    %18 = vector.extract_strided_slice %6 {offsets = [0, 0], sizes = [16, 8], strides = [1, 1]} : vector<16x128xf32> to vector<16x8xf32>
    %19 = vector.extract_strided_slice %6 {offsets = [0, 32], sizes = [16, 8], strides = [1, 1]} : vector<16x128xf32> to vector<16x8xf32>
    %20 = vector.extract_strided_slice %6 {offsets = [0, 64], sizes = [16, 8], strides = [1, 1]} : vector<16x128xf32> to vector<16x8xf32>
    %cst_7 = arith.constant dense<0.000000e+00> : vector<16x16xf32>
    %21 = tpu.matmul %18, %19, %cst_7 {dimension_numbers = #tpu.dot_dimension_numbers<[1], [1], [0], [0], [0, 0, 1, 0], [], []>} : vector<16x8xf32>, vector<16x8xf32>, vector<16x16xf32> -> vector<16x16xf32>
    %22 = arith.addf %21, %14 : vector<16x16xf32>
    %cst_8 = arith.constant dense<0xFF800000> : vector<16xf32>
    %23 = vector.multi_reduction <maximumf>, %22, %cst_8 [1] : vector<16x16xf32> to vector<16xf32>
    %24 = vector.shape_cast %23 : vector<16xf32> to vector<16x1xf32>
    %25 = vector.broadcast %24 : vector<16x1xf32> to vector<16x16xf32>
    %26 = arith.subf %22, %25 : vector<16x16xf32>
    %27 = math.exp %26 : vector<16x16xf32>
    %cst_9 = arith.constant dense<0.000000e+00> : vector<16xf32>
    %28 = vector.multi_reduction <add>, %27, %cst_9 [1] : vector<16x16xf32> to vector<16xf32>
    %29 = vector.shape_cast %28 : vector<16xf32> to vector<16x1xf32>
    %cst_10 = arith.constant dense<0.000000e+00> : vector<16x8xf32>
    %30 = tpu.matmul %27, %20, %cst_10 {dimension_numbers = #tpu.dot_dimension_numbers<[1], [0], [0], [1], [0, 0, 1, 1], [], []>} : vector<16x16xf32>, vector<16x8xf32>, vector<16x8xf32> -> vector<16x8xf32>
    %31 = tpu.reciprocal %29 : vector<16x1xf32> -> vector<16x1xf32>
    %32 = vector.broadcast %31 : vector<16x1xf32> to vector<16x8xf32>
    %33 = arith.mulf %30, %32 : vector<16x8xf32>
    %34 = vector.extract_strided_slice %1 {offsets = [0, 96], sizes = [8, 32], strides = [1, 1]} : vector<32x128xf32> to vector<8x32xf32>
    %cst_11 = arith.constant dense<0.000000e+00> : vector<16x32xf32>
    %35 = tpu.matmul %33, %34, %cst_11 {dimension_numbers = #tpu.dot_dimension_numbers<[1], [0], [0], [1], [0, 0, 1, 1], [], []>} : vector<16x8xf32>, vector<8x32xf32>, vector<16x32xf32> -> vector<16x32xf32>
    %36 = arith.addf %17, %35 : vector<16x32xf32>
    %37 = vector.extract_strided_slice %6 {offsets = [0, 8], sizes = [16, 8], strides = [1, 1]} : vector<16x128xf32> to vector<16x8xf32>
    %38 = vector.extract_strided_slice %6 {offsets = [0, 40], sizes = [16, 8], strides = [1, 1]} : vector<16x128xf32> to vector<16x8xf32>
    %39 = vector.extract_strided_slice %6 {offsets = [0, 72], sizes = [16, 8], strides = [1, 1]} : vector<16x128xf32> to vector<16x8xf32>
    %cst_12 = arith.constant dense<0.000000e+00> : vector<16x16xf32>
    %40 = tpu.matmul %37, %38, %cst_12 {dimension_numbers = #tpu.dot_dimension_numbers<[1], [1], [0], [0], [0, 0, 1, 0], [], []>} : vector<16x8xf32>, vector<16x8xf32>, vector<16x16xf32> -> vector<16x16xf32>
    %41 = arith.addf %40, %14 : vector<16x16xf32>
    %cst_13 = arith.constant dense<0xFF800000> : vector<16xf32>
    %42 = vector.multi_reduction <maximumf>, %41, %cst_13 [1] : vector<16x16xf32> to vector<16xf32>
    %43 = vector.shape_cast %42 : vector<16xf32> to vector<16x1xf32>
    %44 = vector.broadcast %43 : vector<16x1xf32> to vector<16x16xf32>
    %45 = arith.subf %41, %44 : vector<16x16xf32>
    %46 = math.exp %45 : vector<16x16xf32>
    %cst_14 = arith.constant dense<0.000000e+00> : vector<16xf32>
    %47 = vector.multi_reduction <add>, %46, %cst_14 [1] : vector<16x16xf32> to vector<16xf32>
    %48 = vector.shape_cast %47 : vector<16xf32> to vector<16x1xf32>
    %cst_15 = arith.constant dense<0.000000e+00> : vector<16x8xf32>
    %49 = tpu.matmul %46, %39, %cst_15 {dimension_numbers = #tpu.dot_dimension_numbers<[1], [0], [0], [1], [0, 0, 1, 1], [], []>} : vector<16x16xf32>, vector<16x8xf32>, vector<16x8xf32> -> vector<16x8xf32>
    %50 = tpu.reciprocal %48 : vector<16x1xf32> -> vector<16x1xf32>
    %51 = vector.broadcast %50 : vector<16x1xf32> to vector<16x8xf32>
    %52 = arith.mulf %49, %51 : vector<16x8xf32>
    %53 = vector.extract_strided_slice %1 {offsets = [8, 96], sizes = [8, 32], strides = [1, 1]} : vector<32x128xf32> to vector<8x32xf32>
    %cst_16 = arith.constant dense<0.000000e+00> : vector<16x32xf32>
    %54 = tpu.matmul %52, %53, %cst_16 {dimension_numbers = #tpu.dot_dimension_numbers<[1], [0], [0], [1], [0, 0, 1, 1], [], []>} : vector<16x8xf32>, vector<8x32xf32>, vector<16x32xf32> -> vector<16x32xf32>
    %55 = arith.addf %36, %54 : vector<16x32xf32>
    %56 = vector.extract_strided_slice %6 {offsets = [0, 16], sizes = [16, 8], strides = [1, 1]} : vector<16x128xf32> to vector<16x8xf32>
    %57 = vector.extract_strided_slice %6 {offsets = [0, 48], sizes = [16, 8], strides = [1, 1]} : vector<16x128xf32> to vector<16x8xf32>
    %58 = vector.extract_strided_slice %6 {offsets = [0, 80], sizes = [16, 8], strides = [1, 1]} : vector<16x128xf32> to vector<16x8xf32>
    %cst_17 = arith.constant dense<0.000000e+00> : vector<16x16xf32>
    %59 = tpu.matmul %56, %57, %cst_17 {dimension_numbers = #tpu.dot_dimension_numbers<[1], [1], [0], [0], [0, 0, 1, 0], [], []>} : vector<16x8xf32>, vector<16x8xf32>, vector<16x16xf32> -> vector<16x16xf32>
    %60 = arith.addf %59, %14 : vector<16x16xf32>
    %cst_18 = arith.constant dense<0xFF800000> : vector<16xf32>
    %61 = vector.multi_reduction <maximumf>, %60, %cst_18 [1] : vector<16x16xf32> to vector<16xf32>
    %62 = vector.shape_cast %61 : vector<16xf32> to vector<16x1xf32>
    %63 = vector.broadcast %62 : vector<16x1xf32> to vector<16x16xf32>
    %64 = arith.subf %60, %63 : vector<16x16xf32>
    %65 = math.exp %64 : vector<16x16xf32>
    %cst_19 = arith.constant dense<0.000000e+00> : vector<16xf32>
    %66 = vector.multi_reduction <add>, %65, %cst_19 [1] : vector<16x16xf32> to vector<16xf32>
    %67 = vector.shape_cast %66 : vector<16xf32> to vector<16x1xf32>
    %cst_20 = arith.constant dense<0.000000e+00> : vector<16x8xf32>
    %68 = tpu.matmul %65, %58, %cst_20 {dimension_numbers = #tpu.dot_dimension_numbers<[1], [0], [0], [1], [0, 0, 1, 1], [], []>} : vector<16x16xf32>, vector<16x8xf32>, vector<16x8xf32> -> vector<16x8xf32>
    %69 = tpu.reciprocal %67 : vector<16x1xf32> -> vector<16x1xf32>
    %70 = vector.broadcast %69 : vector<16x1xf32> to vector<16x8xf32>
    %71 = arith.mulf %68, %70 : vector<16x8xf32>
    %72 = vector.extract_strided_slice %1 {offsets = [16, 96], sizes = [8, 32], strides = [1, 1]} : vector<32x128xf32> to vector<8x32xf32>
    %cst_21 = arith.constant dense<0.000000e+00> : vector<16x32xf32>
    %73 = tpu.matmul %71, %72, %cst_21 {dimension_numbers = #tpu.dot_dimension_numbers<[1], [0], [0], [1], [0, 0, 1, 1], [], []>} : vector<16x8xf32>, vector<8x32xf32>, vector<16x32xf32> -> vector<16x32xf32>
    %74 = arith.addf %55, %73 : vector<16x32xf32>
    %75 = vector.extract_strided_slice %6 {offsets = [0, 24], sizes = [16, 8], strides = [1, 1]} : vector<16x128xf32> to vector<16x8xf32>
    %76 = vector.extract_strided_slice %6 {offsets = [0, 56], sizes = [16, 8], strides = [1, 1]} : vector<16x128xf32> to vector<16x8xf32>
    %77 = vector.extract_strided_slice %6 {offsets = [0, 88], sizes = [16, 8], strides = [1, 1]} : vector<16x128xf32> to vector<16x8xf32>
    %cst_22 = arith.constant dense<0.000000e+00> : vector<16x16xf32>
    %78 = tpu.matmul %75, %76, %cst_22 {dimension_numbers = #tpu.dot_dimension_numbers<[1], [1], [0], [0], [0, 0, 1, 0], [], []>} : vector<16x8xf32>, vector<16x8xf32>, vector<16x16xf32> -> vector<16x16xf32>
    %79 = arith.addf %78, %14 : vector<16x16xf32>
    %cst_23 = arith.constant dense<0xFF800000> : vector<16xf32>
    %80 = vector.multi_reduction <maximumf>, %79, %cst_23 [1] : vector<16x16xf32> to vector<16xf32>
    %81 = vector.shape_cast %80 : vector<16xf32> to vector<16x1xf32>
    %82 = vector.broadcast %81 : vector<16x1xf32> to vector<16x16xf32>
    %83 = arith.subf %79, %82 : vector<16x16xf32>
    %84 = math.exp %83 : vector<16x16xf32>
    %cst_24 = arith.constant dense<0.000000e+00> : vector<16xf32>
    %85 = vector.multi_reduction <add>, %84, %cst_24 [1] : vector<16x16xf32> to vector<16xf32>
    %86 = vector.shape_cast %85 : vector<16xf32> to vector<16x1xf32>
    %cst_25 = arith.constant dense<0.000000e+00> : vector<16x8xf32>
    %87 = tpu.matmul %84, %77, %cst_25 {dimension_numbers = #tpu.dot_dimension_numbers<[1], [0], [0], [1], [0, 0, 1, 1], [], []>} : vector<16x16xf32>, vector<16x8xf32>, vector<16x8xf32> -> vector<16x8xf32>
    %88 = tpu.reciprocal %86 : vector<16x1xf32> -> vector<16x1xf32>
    %89 = vector.broadcast %88 : vector<16x1xf32> to vector<16x8xf32>
    %90 = arith.mulf %87, %89 : vector<16x8xf32>
    %91 = vector.extract_strided_slice %1 {offsets = [24, 96], sizes = [8, 32], strides = [1, 1]} : vector<32x128xf32> to vector<8x32xf32>
    %cst_26 = arith.constant dense<0.000000e+00> : vector<16x32xf32>
    %92 = tpu.matmul %90, %91, %cst_26 {dimension_numbers = #tpu.dot_dimension_numbers<[1], [0], [0], [1], [0, 0, 1, 1], [], []>} : vector<16x8xf32>, vector<8x32xf32>, vector<16x32xf32> -> vector<16x32xf32>
    %93 = arith.addf %74, %92 : vector<16x32xf32>
    %cst_27 = arith.constant dense<0.000000e+00> : vector<16xf32>
    %94 = vector.multi_reduction <add>, %93, %cst_27 [1] : vector<16x32xf32> to vector<16xf32>
    %95 = vector.shape_cast %94 : vector<16xf32> to vector<16x1xf32>
    %cst_28 = arith.constant 3.200000e+01 : f32
    %96 = vector.broadcast %cst_28 : f32 to vector<16x1xf32>
    %97 = arith.divf %95, %96 : vector<16x1xf32>
    %98 = vector.broadcast %97 : vector<16x1xf32> to vector<16x32xf32>
    %99 = arith.subf %93, %98 : vector<16x32xf32>
    %100 = arith.mulf %99, %99 : vector<16x32xf32>
    %cst_29 = arith.constant dense<0.000000e+00> : vector<16xf32>
    %101 = vector.multi_reduction <add>, %100, %cst_29 [1] : vector<16x32xf32> to vector<16xf32>
    %102 = vector.shape_cast %101 : vector<16xf32> to vector<16x1xf32>
    %cst_30 = arith.constant 3.200000e+01 : f32
    %103 = vector.broadcast %cst_30 : f32 to vector<16x1xf32>
    %104 = arith.divf %102, %103 : vector<16x1xf32>
    %105 = vector.broadcast %97 : vector<16x1xf32> to vector<16x32xf32>
    %106 = arith.subf %93, %105 : vector<16x32xf32>
    %cst_31 = arith.constant 9.99999996E-13 : f32
    %107 = vector.broadcast %cst_31 : f32 to vector<16x1xf32>
    %108 = arith.addf %104, %107 : vector<16x1xf32>
    %109 = math.rsqrt %108 : vector<16x1xf32>
    %110 = vector.broadcast %109 : vector<16x1xf32> to vector<16x32xf32>
    %111 = arith.mulf %106, %110 : vector<16x32xf32>
    %112 = vector.extract_strided_slice %2 {offsets = [1, 0], sizes = [1, 32], strides = [1, 1]} : vector<2x128xf32> to vector<1x32xf32>
    %113 = vector.extract_strided_slice %2 {offsets = [1, 32], sizes = [1, 32], strides = [1, 1]} : vector<2x128xf32> to vector<1x32xf32>
    %114 = vector.broadcast %112 : vector<1x32xf32> to vector<16x32xf32>
    %115 = arith.mulf %111, %114 : vector<16x32xf32>
    %116 = vector.broadcast %113 : vector<1x32xf32> to vector<16x32xf32>
    %117 = arith.addf %115, %116 : vector<16x32xf32>
    %c0_32 = arith.constant 0 : index
    %c0_33 = arith.constant 0 : index
    %118 = vector.load %arg4[%c0_32, %c0_33] : memref<16x32xf32, #tpu.memory_space<vmem>>, vector<16x32xf32>
    tpu.vector_store %arg4[%c0_32, %c0_33], %117 {strides = array<i32>} : memref<16x32xf32, #tpu.memory_space<vmem>>, vector<16x32xf32>,
    return
  }
  func.func @transform_0(%arg0: i32) -> (i32, i32) {
    %c0_i32 = arith.constant 0 : i32
    %c0_i32_0 = arith.constant 0 : i32
    %c0_i32_1 = arith.constant 0 : i32
    return %c0_i32, %c0_i32_0 : i32, i32
  }
  func.func @transform_1(%arg0: i32) -> (i32, i32) {
    %c0_i32 = arith.constant 0 : i32
    %c0_i32_0 = arith.constant 0 : i32
    %c0_i32_1 = arith.constant 0 : i32
    return %c0_i32, %c0_i32_0 : i32, i32
  }
  func.func @transform_2(%arg0: i32) -> (i32, i32) {
    %c0_i32 = arith.constant 0 : i32
    %c0_i32_0 = arith.constant 0 : i32
    %c0_i32_1 = arith.constant 0 : i32
    return %c0_i32, %c0_i32_0 : i32, i32
  }
  func.func @transform_3(%arg0: i32) -> (i32, i32) {
    %c0_i32 = arith.constant 0 : i32
    %c0_i32_0 = arith.constant 0 : i32
    %c0_i32_1 = arith.constant 0 : i32
    return %c0_i32, %c0_i32_0 : i32, i32
  }
}

</mosaic_0001>

<llo_original>
// kernel: iqm_attention.1
$region0: #{iqm_attention.1}
  #allocation0 [shape = 'u32[]', space=smem, size = 0x4, offset = 0x4, fixed_abs, tag = 'smem constant byte address 0x4 - core index']
  #allocation1 [shape = 'u32[144,128]{1,0:T(1,128)}', space=vmem, size = 0x12000, scoped, tag = 'internal scratch']
  %s0 = inlined_call_operand.hbm [shape: f32[16,32], index: 0, kind: input, shape index: {}]
  %s1 = inlined_call_operand.hbm [shape: f32[32,128], index: 1, kind: input, shape index: {}]
  %s2 = inlined_call_operand.vmem [shape: f32[2,128], index: 2, kind: input, shape index: {}]
  %s3 = inlined_call_operand.hbm [shape: f32[16,32], index: 3, kind: output, shape index: {}]
  %s4 = sld [smem:[#allocation0]]
  $region30: #{iqm_attention.1} parent=0
    _
  %s6 = ssub.s32 1, %s4
  %s7 = scalar_select 0, %s6, %s4
  $region1: #{iqm_attention.1} parent=0
    #allocation2 [shape = 'u8[8192]{0}', space=vmem, size = 0x2000, scoped, tag = 'input window, operand 0, single buffered']
    #allocation3 [shape = 's32[1]{0}', space=sflag, size = 0x4, scoped, tag = 'scoped memory for iqm_attention.1']
    #allocation4 [shape = 's32[1]{0}', space=sflag, size = 0x4, scoped, tag = 'scoped memory for iqm_attention.1']
    #allocation5 [shape = 'u8[16384]{0}', space=vmem, size = 0x4000, scoped, tag = 'input window, operand 1, single buffered']
    #allocation6 [shape = 's32[1]{0}', space=sflag, size = 0x4, scoped, tag = 'scoped memory for iqm_attention.1']
    #allocation7 [shape = 'u8[8192]{0}', space=vmem, size = 0x2000, scoped, tag = 'output window, operand 0, single buffered']
    %8 = vsyncpa [#allocation3], 0
    %9 = vsyncpa [#allocation6], 0
    %10 = vsyncpa [#allocation4], 0
    // Predicated region
    $region2: #{iqm_attention.1} parent=1 // pred_check
      _
    $region3: #{iqm_attention.1} parent=1 // pred_check_branch
      %12 = sbr.rel (0) target = $region5
    $region4: #{iqm_attention.1} parent=1 // pred_region
      %s14 = ssub.s32 256, 256
      %15 = vsyncadd [#allocation3], %s14
      %s16 = sshll.u32 [#allocation2], 4
      %s17 = int_to_ptr.vmem [resolvable:$true] %s16
      %22 = dma.hbm_to_vmem [thread:$0]  %s0, 256, %s17, [#allocation3], 128, 128, 8
    $region5: #{iqm_attention.1} parent=1 // pred_fallthru
      _
    // Predicated region
    $region6: #{iqm_attention.1} parent=1 // pred_check
      _
    $region7: #{iqm_attention.1} parent=1 // pred_check_branch
      %24 = sbr.rel (0) target = $region9
    $region8: #{iqm_attention.1} parent=1 // pred_region
      %s26 = ssub.s32 512, 512
      %27 = vsyncadd [#allocation6], %s26
      %s28 = sshll.u32 [#allocation5], 4
      %s29 = int_to_ptr.vmem [resolvable:$true] %s28
      %34 = dma.hbm_to_vmem [thread:$0]  %s1, 512, %s29, [#allocation6], 128, 128, 8
    $region9: #{iqm_attention.1} parent=1 // pred_fallthru
      _
    // Predicated region
    $region10: #{iqm_attention.1} parent=1 // pred_check
      _
    $region11: #{iqm_attention.1} parent=1 // pred_check_branch
      %36 = sbr.rel (0) target = $region13
    $region12: #{iqm_attention.1} parent=1 // pred_region
      _
    $region13: #{iqm_attention.1} parent=1 // pred_fallthru
      _
    // Predicated region
    $region14: #{iqm_attention.1} parent=1 // pred_check
      _
    $region15: #{iqm_attention.1} parent=1 // pred_check_branch
      %38 = sbr.rel (0) target = $region17
    $region16: #{iqm_attention.1} parent=1 // pred_region
      %39 = dma.done [#allocation3], 256
    $region17: #{iqm_attention.1} parent=1 // pred_fallthru
      _
    // Predicated region
    $region18: #{iqm_attention.1} parent=1 // pred_check
      _
    $region19: #{iqm_attention.1} parent=1 // pred_check_branch
      %41 = sbr.rel (0) target = $region21
    $region20: #{iqm_attention.1} parent=1 // pred_region
      %42 = dma.done [#allocation6], 512
    $region21: #{iqm_attention.1} parent=1 // pred_fallthru
      _
    %v43 = vld [vmem:[#allocation2] sm:$0xff]
    %v44 = vld [vmem:[#allocation2 + $0x8] sm:$0xff]
    %v45 = vld [vmem:[#allocation5] sm:$0xff]
    %v46 = vld [vmem:[#allocation5 + $0x8] sm:$0xff]
    %v47 = vld [vmem:[#allocation5 + $0x10] sm:$0xff]
    %v48 = vld [vmem:[#allocation5 + $0x18] sm:$0xff]
    %v49 = vld [vmem:[%s2] sm:$0x3]
    %v50 = vlaneseq
    %v51 = vshrl.u32 %v50, 7
    %v52 = vsub.s32 0, %v51
    %v53 = vrot.slane %v49, %v52
    %vm54 = vcmask 261120
    %v56 = vsel %vm54, %v43, 0
    %v59 = vsel %vm54, %v44, 0
    %61 = vmatprep.subr.mxu0 0.0
    %62 = vmatpush1.msra.mxu0 0.0
    %63 = vmatprep.subr.mxu0 0.0
    %64 = vmatpush1.msra.mxu0 0.0
    %65 = vmatprep.subr.mxu0 0.0
    %66 = vmatpush1.msra.mxu0 0.0
    %67 = vmatprep.subr.mxu0 0.0
    %68 = vmatpush1.msra.mxu0 0.0
    %69 = vmatprep.subr.mxu0 0.0
    %70 = vmatpush1.msra.mxu0 0.0
    %71 = vmatprep.subr.mxu0 0.0
    %72 = vmatpush1.msra.mxu0 0.0
    %73 = vmatprep.subr.mxu0 0.0
    %74 = vmatpush1.msra.mxu0 0.0
    %75 = vmatprep.subr.mxu0 0.0
    %76 = vmatpush1.msra.mxu0 0.0
    %77 = vmatprep.subr.mxu0 0.0
    %78 = vmatpush1.msra.mxu0 0.0
    %79 = vmatprep.subr.mxu0 0.0
    %80 = vmatpush1.msra.mxu0 0.0
    %81 = vmatprep.subr.mxu0 0.0
    %82 = vmatpush1.msra.mxu0 0.0
    %83 = vmatprep.subr.mxu0 0.0
    %84 = vmatpush1.msra.mxu0 0.0
    %85 = vmatprep.subr.mxu0 0.0
    %86 = vmatpush1.msra.mxu0 %v48
    %87 = vmatprep.subr.mxu0 0.0
    %88 = vmatpush1.msra.mxu0 %v47
    %89 = vmatprep.subr.mxu0 0.0
    %90 = vmatpush1.msra.mxu0 %v46
    %91 = vmatprep.subr.mxu0 0.0
    %92 = vmatpush1.msra.mxu0 %v45
    %93 = vmatprep.subr.mxu0 0.0
    %94 = vmatpush2.msra.mxu0 0.0
    %95 = vmatprep.subr.mxu0 0.0
    %96 = vmatpush2.msra.mxu0 0.0
    %97 = vmatprep.subr.mxu0 0.0
    %98 = vmatpush2.msra.mxu0 0.0
    %99 = vmatprep.subr.mxu0 0.0
    %100 = vmatpush2.msra.mxu0 0.0
    %101 = vmatprep.subr.mxu0 0.0
    %102 = vmatpush2.msra.mxu0 0.0
    %103 = vmatprep.subr.mxu0 0.0
    %104 = vmatpush2.msra.mxu0 0.0
    %105 = vmatprep.subr.mxu0 0.0
    %106 = vmatpush2.msra.mxu0 0.0
    %107 = vmatprep.subr.mxu0 0.0
    %108 = vmatpush2.msra.mxu0 0.0
    %109 = vmatprep.subr.mxu0 0.0
    %110 = vmatpush2.msra.mxu0 0.0
    %111 = vmatprep.subr.mxu0 0.0
    %112 = vmatpush2.msra.mxu0 0.0
    %113 = vmatprep.subr.mxu0 0.0
    %114 = vmatpush2.msra.mxu0 0.0
    %115 = vmatprep.subr.mxu0 0.0
    %116 = vmatpush2.msra.mxu0 0.0
    %117 = vmatprep.subr.mxu0 0.0
    %118 = vmatpush2.msra.mxu0 0.0
    %119 = vmatprep.subr.mxu0 0.0
    %120 = vmatpush2.msra.mxu0 0.0
    %121 = vmatprep.subr.mxu0 0.0
    %122 = vmatpush2.msra.mxu0 0.0
    %123 = vmatprep.subr.mxu0 0.0
    %124 = vmatpush2.msra.mxu0 0.0
    %125 = vmatprep.mubr.f32.mxu0 0.0
    %126 = vmatmul.mubr.f32.gmra.mxu0 %v56
    %v127 = vpop.f32.mrf.mxu0
    %v128 = vadd.f32 %v53, %v127
    %v129 = vpop.f32.mrf.mxu0
    %130 = vmatprep.mubr.f32.mxu0 0.0
    %131 = vmatmul.mubr.f32.gmra.mxu0 %v59
    %v132 = vpop.f32.mrf.mxu0
    %v133 = vadd.f32 %v53, %v132
    %v134 = vpop.f32.mrf.mxu0
    %135 = vdwg.mxu0
    %v136 = vlaneseq
    %v137 = vshrl.u32 %v136, 7
    %v138 = vadd.s32 %v137, 8
    %v139 = vlaneseq
    %v140 = vand.u32 %v139, 127
    %v141 = vxor.u32 %v137, %v140
    %v142 = vxor.u32 %v138, %v140
    %vm143 = vcmp.lt.s32.totalorder %v141, 8
    %vm144 = vcmp.lt.s32.totalorder %v142, 8
    %v145 = vsel %vm143, 0.0, -1e+30
    %v146 = vsel %vm144, 0.0, -1e+30
    %148 = vrot.lane.b32.xlu0 %v53, 32
    %v149 = vpop.permute.xlu0 %148
    %v151 = vadd.f32 %v43, %v149
    %v152 = vadd.f32 %v44, %v149
    %155 = vrot.lane.b32.xlu0 %v128, 96
    %v156 = vpop.permute.xlu0 %155
    %157 = vrot.lane.b32.xlu0 %v133, 96
    %v158 = vpop.permute.xlu0 %157
    %vm159 = vcmask 64512
    %v160 = vsel %vm159, %v128, 0
    %v162 = vsel %vm159, %v133, 0
    %v164 = vsel %vm159, %v156, 0
    %v166 = vsel %vm159, %v158, 0
    %168 = vmatprep.subr.mxu0 0.0
    %169 = vmatpush1.xpose.msra.mxu0 0.0
    %170 = vmatprep.subr.mxu0 0.0
    %171 = vmatpush1.xpose.msra.mxu0 0.0
    %172 = vmatprep.subr.mxu0 0.0
    %173 = vmatpush1.xpose.msra.mxu0 0.0
    %174 = vmatprep.subr.mxu0 0.0
    %175 = vmatpush1.xpose.msra.mxu0 0.0
    %176 = vmatprep.subr.mxu0 0.0
    %177 = vmatpush1.xpose.msra.mxu0 0.0
    %178 = vmatprep.subr.mxu0 0.0
    %179 = vmatpush1.xpose.msra.mxu0 0.0
    %180 = vmatprep.subr.mxu0 0.0
    %181 = vmatpush1.xpose.msra.mxu0 0.0
    %182 = vmatprep.subr.mxu0 0.0
    %183 = vmatpush1.xpose.msra.mxu0 0.0
    %184 = vmatprep.subr.mxu0 0.0
    %185 = vmatpush1.xpose.msra.mxu0 0.0
    %186 = vmatprep.subr.mxu0 0.0
    %187 = vmatpush1.xpose.msra.mxu0 0.0
    %188 = vmatprep.subr.mxu0 0.0
    %189 = vmatpush1.xpose.msra.mxu0 0.0
    %190 = vmatprep.subr.mxu0 0.0
    %191 = vmatpush1.xpose.msra.mxu0 0.0
    %192 = vmatprep.subr.mxu0 0.0
    %193 = vmatpush1.xpose.msra.mxu0 0.0
    %194 = vmatprep.subr.mxu0 0.0
    %195 = vmatpush1.xpose.msra.mxu0 0.0
    %196 = vmatprep.subr.mxu0 0.0
    %197 = vmatpush1.xpose.msra.mxu0 %v166
    %198 = vmatprep.subr.mxu0 0.0
    %199 = vmatpush1.xpose.msra.mxu0 %v164
    %200 = vmatprep.subr.mxu0 0.0
    %201 = vmatpush2.xpose.msra.mxu0 0.0
    %202 = vmatprep.subr.mxu0 0.0
    %203 = vmatpush2.xpose.msra.mxu0 0.0
    %204 = vmatprep.subr.mxu0 0.0
    %205 = vmatpush2.xpose.msra.mxu0 0.0
    %206 = vmatprep.subr.mxu0 0.0
    %207 = vmatpush2.xpose.msra.mxu0 0.0
    %208 = vmatprep.subr.mxu0 0.0
    %209 = vmatpush2.xpose.msra.mxu0 0.0
    %210 = vmatprep.subr.mxu0 0.0
    %211 = vmatpush2.xpose.msra.mxu0 0.0
    %212 = vmatprep.subr.mxu0 0.0
    %213 = vmatpush2.xpose.msra.mxu0 0.0
    %214 = vmatprep.subr.mxu0 0.0
    %215 = vmatpush2.xpose.msra.mxu0 0.0
    %216 = vmatprep.subr.mxu0 0.0
    %217 = vmatpush2.xpose.msra.mxu0 0.0
    %218 = vmatprep.subr.mxu0 0.0
    %219 = vmatpush2.xpose.msra.mxu0 0.0
    %220 = vmatprep.subr.mxu0 0.0
    %221 = vmatpush2.xpose.msra.mxu0 0.0
    %222 = vmatprep.subr.mxu0 0.0
    %223 = vmatpush2.xpose.msra.mxu0 0.0
    %224 = vmatprep.subr.mxu0 0.0
    %225 = vmatpush2.xpose.msra.mxu0 0.0
    %226 = vmatprep.subr.mxu0 0.0
    %227 = vmatpush2.xpose.msra.mxu0 0.0
    %228 = vmatprep.subr.mxu0 0.0
    %229 = vmatpush2.xpose.msra.mxu0 0.0
    %230 = vmatprep.subr.mxu0 0.0
    %231 = vmatpush2.xpose.msra.mxu0 0.0
    %232 = vmatprep.mubr.f32.mxu0 0.0
    %233 = vmatmul.mubr.f32.gmra.mxu0 %v160
    %v234 = vpop.f32.mrf.mxu0
    %v235 = vadd.f32 %v145, %v234
    %v236 = vpop.f32.mrf.mxu0
    %237 = vmatprep.mubr.f32.mxu0 0.0
    %238 = vmatmul.mubr.f32.gmra.mxu0 %v162
    %v239 = vpop.f32.mrf.mxu0
    %v240 = vadd.f32 %v146, %v239
    %v241 = vpop.f32.mrf.mxu0
    %242 = vdwg.mxu0
    %vm243 = vcmask 130048
    %v244 = vsel %vm243, %v235, -inf
    %245 = vmax.xlane.f32.xlu0 %v244
    %v246 = vpop.xlane.xlu0 %245
    %v247 = vsel %vm243, %v240, -inf
    %248 = vmax.xlane.f32.xlu0 %v247
    %v249 = vpop.xlane.xlu0 %248
    %v250 = vsub.f32 %v235, %v246
    %v251 = vsub.f32 %v240, %v249
    %v252 = vmul.f32 %v250, 1.442695
    %v253 = vpow.pop %v252
    %v254 = vmul.f32 %v251, 1.442695
    %v255 = vpow.pop %v254
    %v256 = vsel %vm243, %v253, 0.0
    %257 = vadd.xlane.f32.xlu0 %v256
    %v258 = vpop.xlane.xlu0 %257
    %v259 = vsel %vm243, %v255, 0.0
    %260 = vadd.xlane.f32.xlu0 %v259
    %v261 = vpop.xlane.xlu0 %260
    %262 = vrot.lane.b32.xlu0 %v128, 64
    %v263 = vpop.permute.xlu0 %262
    %264 = vrot.lane.b32.xlu0 %v133, 64
    %v265 = vpop.permute.xlu0 %264
    %v269 = vsel %vm243, %v253, 0
    %v272 = vsel %vm243, %v255, 0
    %274 = vmatprep.subr.mxu0 0.0
    %275 = vmatpush1.msra.mxu0 0.0
    %276 = vmatprep.subr.mxu0 0.0
    %277 = vmatpush1.msra.mxu0 0.0
    %278 = vmatprep.subr.mxu0 0.0
    %279 = vmatpush1.msra.mxu0 0.0
    %280 = vmatprep.subr.mxu0 0.0
    %281 = vmatpush1.msra.mxu0 0.0
    %282 = vmatprep.subr.mxu0 0.0
    %283 = vmatpush1.msra.mxu0 0.0
    %284 = vmatprep.subr.mxu0 0.0
    %285 = vmatpush1.msra.mxu0 0.0
    %286 = vmatprep.subr.mxu0 0.0
    %287 = vmatpush1.msra.mxu0 0.0
    %288 = vmatprep.subr.mxu0 0.0
    %289 = vmatpush1.msra.mxu0 0.0
    %290 = vmatprep.subr.mxu0 0.0
    %291 = vmatpush1.msra.mxu0 0.0
    %292 = vmatprep.subr.mxu0 0.0
    %293 = vmatpush1.msra.mxu0 0.0
    %294 = vmatprep.subr.mxu0 0.0
    %295 = vmatpush1.msra.mxu0 0.0
    %296 = vmatprep.subr.mxu0 0.0
    %297 = vmatpush1.msra.mxu0 0.0
    %298 = vmatprep.subr.mxu0 0.0
    %299 = vmatpush1.msra.mxu0 0.0
    %300 = vmatprep.subr.mxu0 0.0
    %301 = vmatpush1.msra.mxu0 0.0
    %302 = vmatprep.subr.mxu0 0.0
    %303 = vmatpush1.msra.mxu0 %v265
    %304 = vmatprep.subr.mxu0 0.0
    %305 = vmatpush1.msra.mxu0 %v263
    %306 = vmatprep.subr.mxu0 0.0
    %307 = vmatpush2.msra.mxu0 0.0
    %308 = vmatprep.subr.mxu0 0.0
    %309 = vmatpush2.msra.mxu0 0.0
    %310 = vmatprep.subr.mxu0 0.0
    %311 = vmatpush2.msra.mxu0 0.0
    %312 = vmatprep.subr.mxu0 0.0
    %313 = vmatpush2.msra.mxu0 0.0
    %314 = vmatprep.subr.mxu0 0.0
    %315 = vmatpush2.msra.mxu0 0.0
    %316 = vmatprep.subr.mxu0 0.0
    %317 = vmatpush2.msra.mxu0 0.0
    %318 = vmatprep.subr.mxu0 0.0
    %319 = vmatpush2.msra.mxu0 0.0
    %320 = vmatprep.subr.mxu0 0.0
    %321 = vmatpush2.msra.mxu0 0.0
    %322 = vmatprep.subr.mxu0 0.0
    %323 = vmatpush2.msra.mxu0 0.0
    %324 = vmatprep.subr.mxu0 0.0
    %325 = vmatpush2.msra.mxu0 0.0
    %326 = vmatprep.subr.mxu0 0.0
    %327 = vmatpush2.msra.mxu0 0.0
    %328 = vmatprep.subr.mxu0 0.0
    %329 = vmatpush2.msra.mxu0 0.0
    %330 = vmatprep.subr.mxu0 0.0
    %331 = vmatpush2.msra.mxu0 0.0
    %332 = vmatprep.subr.mxu0 0.0
    %333 = vmatpush2.msra.mxu0 0.0
    %334 = vmatprep.subr.mxu0 0.0
    %335 = vmatpush2.msra.mxu0 0.0
    %336 = vmatprep.subr.mxu0 0.0
    %337 = vmatpush2.msra.mxu0 0.0
    %338 = vmatprep.mubr.f32.mxu0 0.0
    %339 = vmatmul.mubr.f32.gmra.mxu0 %v269
    %v340 = vpop.f32.mrf.mxu0
    %v341 = vadd.f32 0.0, %v340
    %v342 = vpop.f32.mrf.mxu0
    %343 = vmatprep.mubr.f32.mxu0 0.0
    %344 = vmatmul.mubr.f32.gmra.mxu0 %v272
    %v345 = vpop.f32.mrf.mxu0
    %v346 = vadd.f32 0.0, %v345
    %v347 = vpop.f32.mrf.mxu0
    %348 = vdwg.mxu0
    %v349 = vrcp.pop %v258
    %v350 = vrcp.pop %v261
    %v351 = vmul.f32 %v341, %v349
    %v352 = vmul.f32 %v346, %v350
    %354 = vrot.lane.b32.xlu0 %v45, 32
    %v355 = vpop.permute.xlu0 %354
    %v358 = vsel %vm159, %v351, 0
    %v361 = vsel %vm159, %v352, 0
    %363 = vmatprep.subr.mxu0 0.0
    %364 = vmatpush1.msra.mxu0 0.0
    %365 = vmatprep.subr.mxu0 0.0
    %366 = vmatpush1.msra.mxu0 0.0
    %367 = vmatprep.subr.mxu0 0.0
    %368 = vmatpush1.msra.mxu0 0.0
    %369 = vmatprep.subr.mxu0 0.0
    %370 = vmatpush1.msra.mxu0 0.0
    %371 = vmatprep.subr.mxu0 0.0
    %372 = vmatpush1.msra.mxu0 0.0
    %373 = vmatprep.subr.mxu0 0.0
    %374 = vmatpush1.msra.mxu0 0.0
    %375 = vmatprep.subr.mxu0 0.0
    %376 = vmatpush1.msra.mxu0 0.0
    %377 = vmatprep.subr.mxu0 0.0
    %378 = vmatpush1.msra.mxu0 0.0
    %379 = vmatprep.subr.mxu0 0.0
    %380 = vmatpush1.msra.mxu0 0.0
    %381 = vmatprep.subr.mxu0 0.0
    %382 = vmatpush1.msra.mxu0 0.0
    %383 = vmatprep.subr.mxu0 0.0
    %384 = vmatpush1.msra.mxu0 0.0
    %385 = vmatprep.subr.mxu0 0.0
    %386 = vmatpush1.msra.mxu0 0.0
    %387 = vmatprep.subr.mxu0 0.0
    %388 = vmatpush1.msra.mxu0 0.0
    %389 = vmatprep.subr.mxu0 0.0
    %390 = vmatpush1.msra.mxu0 0.0
    %391 = vmatprep.subr.mxu0 0.0
    %392 = vmatpush1.msra.mxu0 0.0
    %393 = vmatprep.subr.mxu0 0.0
    %394 = vmatpush1.msra.mxu0 %v355
    %395 = vmatprep.subr.mxu0 0.0
    %396 = vmatpush2.msra.mxu0 0.0
    %397 = vmatprep.subr.mxu0 0.0
    %398 = vmatpush2.msra.mxu0 0.0
    %399 = vmatprep.subr.mxu0 0.0
    %400 = vmatpush2.msra.mxu0 0.0
    %401 = vmatprep.subr.mxu0 0.0
    %402 = vmatpush2.msra.mxu0 0.0
    %403 = vmatprep.subr.mxu0 0.0
    %404 = vmatpush2.msra.mxu0 0.0
    %405 = vmatprep.subr.mxu0 0.0
    %406 = vmatpush2.msra.mxu0 0.0
    %407 = vmatprep.subr.mxu0 0.0
    %408 = vmatpush2.msra.mxu0 0.0
    %409 = vmatprep.subr.mxu0 0.0
    %410 = vmatpush2.msra.mxu0 0.0
    %411 = vmatprep.subr.mxu0 0.0
    %412 = vmatpush2.msra.mxu0 0.0
    %413 = vmatprep.subr.mxu0 0.0
    %414 = vmatpush2.msra.mxu0 0.0
    %415 = vmatprep.subr.mxu0 0.0
    %416 = vmatpush2.msra.mxu0 0.0
    %417 = vmatprep.subr.mxu0 0.0
    %418 = vmatpush2.msra.mxu0 0.0
    %419 = vmatprep.subr.mxu0 0.0
    %420 = vmatpush2.msra.mxu0 0.0
    %421 = vmatprep.subr.mxu0 0.0
    %422 = vmatpush2.msra.mxu0 0.0
    %423 = vmatprep.subr.mxu0 0.0
    %424 = vmatpush2.msra.mxu0 0.0
    %425 = vmatprep.subr.mxu0 0.0
    %426 = vmatpush2.msra.mxu0 0.0
    %427 = vmatprep.mubr.f32.mxu0 0.0
    %428 = vmatmul.mubr.f32.gmra.mxu0 %v358
    %v429 = vpop.f32.mrf.mxu0
    %v430 = vadd.f32 0.0, %v429
    %v431 = vpop.f32.mrf.mxu0
    %432 = vmatprep.mubr.f32.mxu0 0.0
    %433 = vmatmul.mubr.f32.gmra.mxu0 %v361
    %v434 = vpop.f32.mrf.mxu0
    %v435 = vadd.f32 0.0, %v434
    %v436 = vpop.f32.mrf.mxu0
    %437 = vdwg.mxu0
    %v438 = vadd.f32 %v151, %v430
    %v439 = vadd.f32 %v152, %v435
    %440 = vrot.lane.b32.xlu0 %v128, 120
    %v441 = vpop.permute.xlu0 %440
    %442 = vrot.lane.b32.xlu0 %v133, 120
    %v443 = vpop.permute.xlu0 %442
    %444 = vrot.lane.b32.xlu0 %v128, 88
    %v445 = vpop.permute.xlu0 %444
    %446 = vrot.lane.b32.xlu0 %v133, 88
    %v447 = vpop.permute.xlu0 %446
    %v448 = vsel %vm159, %v441, 0
    %v450 = vsel %vm159, %v443, 0
    %v452 = vsel %vm159, %v445, 0
    %v454 = vsel %vm159, %v447, 0
    %456 = vmatprep.subr.mxu0 0.0
    %457 = vmatpush1.xpose.msra.mxu0 0.0
    %458 = vmatprep.subr.mxu0 0.0
    %459 = vmatpush1.xpose.msra.mxu0 0.0
    %460 = vmatprep.subr.mxu0 0.0
    %461 = vmatpush1.xpose.msra.mxu0 0.0
    %462 = vmatprep.subr.mxu0 0.0
    %463 = vmatpush1.xpose.msra.mxu0 0.0
    %464 = vmatprep.subr.mxu0 0.0
    %465 = vmatpush1.xpose.msra.mxu0 0.0
    %466 = vmatprep.subr.mxu0 0.0
    %467 = vmatpush1.xpose.msra.mxu0 0.0
    %468 = vmatprep.subr.mxu0 0.0
    %469 = vmatpush1.xpose.msra.mxu0 0.0
    %470 = vmatprep.subr.mxu0 0.0
    %471 = vmatpush1.xpose.msra.mxu0 0.0
    %472 = vmatprep.subr.mxu0 0.0
    %473 = vmatpush1.xpose.msra.mxu0 0.0
    %474 = vmatprep.subr.mxu0 0.0
    %475 = vmatpush1.xpose.msra.mxu0 0.0
    %476 = vmatprep.subr.mxu0 0.0
    %477 = vmatpush1.xpose.msra.mxu0 0.0
    %478 = vmatprep.subr.mxu0 0.0
    %479 = vmatpush1.xpose.msra.mxu0 0.0
    %480 = vmatprep.subr.mxu0 0.0
    %481 = vmatpush1.xpose.msra.mxu0 0.0
    %482 = vmatprep.subr.mxu0 0.0
    %483 = vmatpush1.xpose.msra.mxu0 0.0
    %484 = vmatprep.subr.mxu0 0.0
    %485 = vmatpush1.xpose.msra.mxu0 %v454
    %486 = vmatprep.subr.mxu0 0.0
    %487 = vmatpush1.xpose.msra.mxu0 %v452
    %488 = vmatprep.subr.mxu0 0.0
    %489 = vmatpush2.xpose.msra.mxu0 0.0
    %490 = vmatprep.subr.mxu0 0.0
    %491 = vmatpush2.xpose.msra.mxu0 0.0
    %492 = vmatprep.subr.mxu0 0.0
    %493 = vmatpush2.xpose.msra.mxu0 0.0
    %494 = vmatprep.subr.mxu0 0.0
    %495 = vmatpush2.xpose.msra.mxu0 0.0
    %496 = vmatprep.subr.mxu0 0.0
    %497 = vmatpush2.xpose.msra.mxu0 0.0
    %498 = vmatprep.subr.mxu0 0.0
    %499 = vmatpush2.xpose.msra.mxu0 0.0
    %500 = vmatprep.subr.mxu0 0.0
    %501 = vmatpush2.xpose.msra.mxu0 0.0
    %502 = vmatprep.subr.mxu0 0.0
    %503 = vmatpush2.xpose.msra.mxu0 0.0
    %504 = vmatprep.subr.mxu0 0.0
    %505 = vmatpush2.xpose.msra.mxu0 0.0
    %506 = vmatprep.subr.mxu0 0.0
    %507 = vmatpush2.xpose.msra.mxu0 0.0
    %508 = vmatprep.subr.mxu0 0.0
    %509 = vmatpush2.xpose.msra.mxu0 0.0
    %510 = vmatprep.subr.mxu0 0.0
    %511 = vmatpush2.xpose.msra.mxu0 0.0
    %512 = vmatprep.subr.mxu0 0.0
    %513 = vmatpush2.xpose.msra.mxu0 0.0
    %514 = vmatprep.subr.mxu0 0.0
    %515 = vmatpush2.xpose.msra.mxu0 0.0
    %516 = vmatprep.subr.mxu0 0.0
    %517 = vmatpush2.xpose.msra.mxu0 0.0
    %518 = vmatprep.subr.mxu0 0.0
    %519 = vmatpush2.xpose.msra.mxu0 0.0
    %520 = vmatprep.mubr.f32.mxu0 0.0
    %521 = vmatmul.mubr.f32.gmra.mxu0 %v448
    %v522 = vpop.f32.mrf.mxu0
    %v523 = vadd.f32 %v145, %v522
    %v524 = vpop.f32.mrf.mxu0
    %525 = vmatprep.mubr.f32.mxu0 0.0
    %526 = vmatmul.mubr.f32.gmra.mxu0 %v450
    %v527 = vpop.f32.mrf.mxu0
    %v528 = vadd.f32 %v146, %v527
    %v529 = vpop.f32.mrf.mxu0
    %530 = vdwg.mxu0
    %v531 = vsel %vm243, %v523, -inf
    %532 = vmax.xlane.f32.xlu0 %v531
    %v533 = vpop.xlane.xlu0 %532
    %v534 = vsel %vm243, %v528, -inf
    %535 = vmax.xlane.f32.xlu0 %v534
    %v536 = vpop.xlane.xlu0 %535
    %v537 = vsub.f32 %v523, %v533
    %v538 = vsub.f32 %v528, %v536
    %v539 = vmul.f32 %v537, 1.442695
    %v540 = vpow.pop %v539
    %v541 = vmul.f32 %v538, 1.442695
    %v542 = vpow.pop %v541
    %v543 = vsel %vm243, %v540, 0.0
    %544 = vadd.xlane.f32.xlu0 %v543
    %v545 = vpop.xlane.xlu0 %544
    %v546 = vsel %vm243, %v542, 0.0
    %547 = vadd.xlane.f32.xlu0 %v546
    %v548 = vpop.xlane.xlu0 %547
    %549 = vrot.lane.b32.xlu0 %v128, 56
    %v550 = vpop.permute.xlu0 %549
    %551 = vrot.lane.b32.xlu0 %v133, 56
    %v552 = vpop.permute.xlu0 %551
    %v556 = vsel %vm243, %v540, 0
    %v559 = vsel %vm243, %v542, 0
    %561 = vmatprep.subr.mxu0 0.0
    %562 = vmatpush1.msra.mxu0 0.0
    %563 = vmatprep.subr.mxu0 0.0
    %564 = vmatpush1.msra.mxu0 0.0
    %565 = vmatprep.subr.mxu0 0.0
    %566 = vmatpush1.msra.mxu0 0.0
    %567 = vmatprep.subr.mxu0 0.0
    %568 = vmatpush1.msra.mxu0 0.0
    %569 = vmatprep.subr.mxu0 0.0
    %570 = vmatpush1.msra.mxu0 0.0
    %571 = vmatprep.subr.mxu0 0.0
    %572 = vmatpush1.msra.mxu0 0.0
    %573 = vmatprep.subr.mxu0 0.0
    %574 = vmatpush1.msra.mxu0 0.0
    %575 = vmatprep.subr.mxu0 0.0
    %576 = vmatpush1.msra.mxu0 0.0
    %577 = vmatprep.subr.mxu0 0.0
    %578 = vmatpush1.msra.mxu0 0.0
    %579 = vmatprep.subr.mxu0 0.0
    %580 = vmatpush1.msra.mxu0 0.0
    %581 = vmatprep.subr.mxu0 0.0
    %582 = vmatpush1.msra.mxu0 0.0
    %583 = vmatprep.subr.mxu0 0.0
    %584 = vmatpush1.msra.mxu0 0.0
    %585 = vmatprep.subr.mxu0 0.0
    %586 = vmatpush1.msra.mxu0 0.0
    %587 = vmatprep.subr.mxu0 0.0
    %588 = vmatpush1.msra.mxu0 0.0
    %589 = vmatprep.subr.mxu0 0.0
    %590 = vmatpush1.msra.mxu0 %v552
    %591 = vmatprep.subr.mxu0 0.0
    %592 = vmatpush1.msra.mxu0 %v550
    %593 = vmatprep.subr.mxu0 0.0
    %594 = vmatpush2.msra.mxu0 0.0
    %595 = vmatprep.subr.mxu0 0.0
    %596 = vmatpush2.msra.mxu0 0.0
    %597 = vmatprep.subr.mxu0 0.0
    %598 = vmatpush2.msra.mxu0 0.0
    %599 = vmatprep.subr.mxu0 0.0
    %600 = vmatpush2.msra.mxu0 0.0
    %601 = vmatprep.subr.mxu0 0.0
    %602 = vmatpush2.msra.mxu0 0.0
    %603 = vmatprep.subr.mxu0 0.0
    %604 = vmatpush2.msra.mxu0 0.0
    %605 = vmatprep.subr.mxu0 0.0
    %606 = vmatpush2.msra.mxu0 0.0
    %607 = vmatprep.subr.mxu0 0.0
    %608 = vmatpush2.msra.mxu0 0.0
    %609 = vmatprep.subr.mxu0 0.0
    %610 = vmatpush2.msra.mxu0 0.0
    %611 = vmatprep.subr.mxu0 0.0
    %612 = vmatpush2.msra.mxu0 0.0
    %613 = vmatprep.subr.mxu0 0.0
    %614 = vmatpush2.msra.mxu0 0.0
    %615 = vmatprep.subr.mxu0 0.0
    %616 = vmatpush2.msra.mxu0 0.0
    %617 = vmatprep.subr.mxu0 0.0
    %618 = vmatpush2.msra.mxu0 0.0
    %619 = vmatprep.subr.mxu0 0.0
    %620 = vmatpush2.msra.mxu0 0.0
    %621 = vmatprep.subr.mxu0 0.0
    %622 = vmatpush2.msra.mxu0 0.0
    %623 = vmatprep.subr.mxu0 0.0
    %624 = vmatpush2.msra.mxu0 0.0
    %625 = vmatprep.mubr.f32.mxu0 0.0
    %626 = vmatmul.mubr.f32.gmra.mxu0 %v556
    %v627 = vpop.f32.mrf.mxu0
    %v628 = vadd.f32 0.0, %v627
    %v629 = vpop.f32.mrf.mxu0
    %630 = vmatprep.mubr.f32.mxu0 0.0
    %631 = vmatmul.mubr.f32.gmra.mxu0 %v559
    %v632 = vpop.f32.mrf.mxu0
    %v633 = vadd.f32 0.0, %v632
    %v634 = vpop.f32.mrf.mxu0
    %635 = vdwg.mxu0
    %v636 = vrcp.pop %v545
    %v637 = vrcp.pop %v548
    %v638 = vmul.f32 %v628, %v636
    %v639 = vmul.f32 %v633, %v637
    %641 = vrot.lane.b32.xlu0 %v46, 32
    %v642 = vpop.permute.xlu0 %641
    %v645 = vsel %vm159, %v638, 0
    %v648 = vsel %vm159, %v639, 0
    %650 = vmatprep.subr.mxu0 0.0
    %651 = vmatpush1.msra.mxu0 0.0
    %652 = vmatprep.subr.mxu0 0.0
    %653 = vmatpush1.msra.mxu0 0.0
    %654 = vmatprep.subr.mxu0 0.0
    %655 = vmatpush1.msra.mxu0 0.0
    %656 = vmatprep.subr.mxu0 0.0
    %657 = vmatpush1.msra.mxu0 0.0
    %658 = vmatprep.subr.mxu0 0.0
    %659 = vmatpush1.msra.mxu0 0.0
    %660 = vmatprep.subr.mxu0 0.0
    %661 = vmatpush1.msra.mxu0 0.0
    %662 = vmatprep.subr.mxu0 0.0
    %663 = vmatpush1.msra.mxu0 0.0
    %664 = vmatprep.subr.mxu0 0.0
    %665 = vmatpush1.msra.mxu0 0.0
    %666 = vmatprep.subr.mxu0 0.0
    %667 = vmatpush1.msra.mxu0 0.0
    %668 = vmatprep.subr.mxu0 0.0
    %669 = vmatpush1.msra.mxu0 0.0
    %670 = vmatprep.subr.mxu0 0.0
    %671 = vmatpush1.msra.mxu0 0.0
    %672 = vmatprep.subr.mxu0 0.0
    %673 = vmatpush1.msra.mxu0 0.0
    %674 = vmatprep.subr.mxu0 0.0
    %675 = vmatpush1.msra.mxu0 0.0
    %676 = vmatprep.subr.mxu0 0.0
    %677 = vmatpush1.msra.mxu0 0.0
    %678 = vmatprep.subr.mxu0 0.0
    %679 = vmatpush1.msra.mxu0 0.0
    %680 = vmatprep.subr.mxu0 0.0
    %681 = vmatpush1.msra.mxu0 %v642
    %682 = vmatprep.subr.mxu0 0.0
    %683 = vmatpush2.msra.mxu0 0.0
    %684 = vmatprep.subr.mxu0 0.0
    %685 = vmatpush2.msra.mxu0 0.0
    %686 = vmatprep.subr.mxu0 0.0
    %687 = vmatpush2.msra.mxu0 0.0
    %688 = vmatprep.subr.mxu0 0.0
    %689 = vmatpush2.msra.mxu0 0.0
    %690 = vmatprep.subr.mxu0 0.0
    %691 = vmatpush2.msra.mxu0 0.0
    %692 = vmatprep.subr.mxu0 0.0
    %693 = vmatpush2.msra.mxu0 0.0
    %694 = vmatprep.subr.mxu0 0.0
    %695 = vmatpush2.msra.mxu0 0.0
    %696 = vmatprep.subr.mxu0 0.0
    %697 = vmatpush2.msra.mxu0 0.0
    %698 = vmatprep.subr.mxu0 0.0
    %699 = vmatpush2.msra.mxu0 0.0
    %700 = vmatprep.subr.mxu0 0.0
    %701 = vmatpush2.msra.mxu0 0.0
    %702 = vmatprep.subr.mxu0 0.0
    %703 = vmatpush2.msra.mxu0 0.0
    %704 = vmatprep.subr.mxu0 0.0
    %705 = vmatpush2.msra.mxu0 0.0
    %706 = vmatprep.subr.mxu0 0.0
    %707 = vmatpush2.msra.mxu0 0.0
    %708 = vmatprep.subr.mxu0 0.0
    %709 = vmatpush2.msra.mxu0 0.0
    %710 = vmatprep.subr.mxu0 0.0
    %711 = vmatpush2.msra.mxu0 0.0
    %712 = vmatprep.subr.mxu0 0.0
    %713 = vmatpush2.msra.mxu0 0.0
    %714 = vmatprep.mubr.f32.mxu0 0.0
    %715 = vmatmul.mubr.f32.gmra.mxu0 %v645
    %v716 = vpop.f32.mrf.mxu0
    %v717 = vadd.f32 0.0, %v716
    %v718 = vpop.f32.mrf.mxu0
    %719 = vmatprep.mubr.f32.mxu0 0.0
    %720 = vmatmul.mubr.f32.gmra.mxu0 %v648
    %v721 = vpop.f32.mrf.mxu0
    %v722 = vadd.f32 0.0, %v721
    %v723 = vpop.f32.mrf.mxu0
    %724 = vdwg.mxu0
    %v725 = vadd.f32 %v438, %v717
    %v726 = vadd.f32 %v439, %v722
    %727 = vrot.lane.b32.xlu0 %v128, 112
    %v728 = vpop.permute.xlu0 %727
    %729 = vrot.lane.b32.xlu0 %v133, 112
    %v730 = vpop.permute.xlu0 %729
    %731 = vrot.lane.b32.xlu0 %v128, 80
    %v732 = vpop.permute.xlu0 %731
    %733 = vrot.lane.b32.xlu0 %v133, 80
    %v734 = vpop.permute.xlu0 %733
    %v735 = vsel %vm159, %v728, 0
    %v737 = vsel %vm159, %v730, 0
    %v739 = vsel %vm159, %v732, 0
    %v741 = vsel %vm159, %v734, 0
    %743 = vmatprep.subr.mxu0 0.0
    %744 = vmatpush1.xpose.msra.mxu0 0.0
    %745 = vmatprep.subr.mxu0 0.0
    %746 = vmatpush1.xpose.msra.mxu0 0.0
    %747 = vmatprep.subr.mxu0 0.0
    %748 = vmatpush1.xpose.msra.mxu0 0.0
    %749 = vmatprep.subr.mxu0 0.0
    %750 = vmatpush1.xpose.msra.mxu0 0.0
    %751 = vmatprep.subr.mxu0 0.0
    %752 = vmatpush1.xpose.msra.mxu0 0.0
    %753 = vmatprep.subr.mxu0 0.0
    %754 = vmatpush1.xpose.msra.mxu0 0.0
    %755 = vmatprep.subr.mxu0 0.0
    %756 = vmatpush1.xpose.msra.mxu0 0.0
    %757 = vmatprep.subr.mxu0 0.0
    %758 = vmatpush1.xpose.msra.mxu0 0.0
    %759 = vmatprep.subr.mxu0 0.0
    %760 = vmatpush1.xpose.msra.mxu0 0.0
    %761 = vmatprep.subr.mxu0 0.0
    %762 = vmatpush1.xpose.msra.mxu0 0.0
    %763 = vmatprep.subr.mxu0 0.0
    %764 = vmatpush1.xpose.msra.mxu0 0.0
    %765 = vmatprep.subr.mxu0 0.0
    %766 = vmatpush1.xpose.msra.mxu0 0.0
    %767 = vmatprep.subr.mxu0 0.0
    %768 = vmatpush1.xpose.msra.mxu0 0.0
    %769 = vmatprep.subr.mxu0 0.0
    %770 = vmatpush1.xpose.msra.mxu0 0.0
    %771 = vmatprep.subr.mxu0 0.0
    %772 = vmatpush1.xpose.msra.mxu0 %v741
    %773 = vmatprep.subr.mxu0 0.0
    %774 = vmatpush1.xpose.msra.mxu0 %v739
    %775 = vmatprep.subr.mxu0 0.0
    %776 = vmatpush2.xpose.msra.mxu0 0.0
    %777 = vmatprep.subr.mxu0 0.0
    %778 = vmatpush2.xpose.msra.mxu0 0.0
    %779 = vmatprep.subr.mxu0 0.0
    %780 = vmatpush2.xpose.msra.mxu0 0.0
    %781 = vmatprep.subr.mxu0 0.0
    %782 = vmatpush2.xpose.msra.mxu0 0.0
    %783 = vmatprep.subr.mxu0 0.0
    %784 = vmatpush2.xpose.msra.mxu0 0.0
    %785 = vmatprep.subr.mxu0 0.0
    %786 = vmatpush2.xpose.msra.mxu0 0.0
    %787 = vmatprep.subr.mxu0 0.0
    %788 = vmatpush2.xpose.msra.mxu0 0.0
    %789 = vmatprep.subr.mxu0 0.0
    %790 = vmatpush2.xpose.msra.mxu0 0.0
    %791 = vmatprep.subr.mxu0 0.0
    %792 = vmatpush2.xpose.msra.mxu0 0.0
    %793 = vmatprep.subr.mxu0 0.0
    %794 = vmatpush2.xpose.msra.mxu0 0.0
    %795 = vmatprep.subr.mxu0 0.0
    %796 = vmatpush2.xpose.msra.mxu0 0.0
    %797 = vmatprep.subr.mxu0 0.0
    %798 = vmatpush2.xpose.msra.mxu0 0.0
    %799 = vmatprep.subr.mxu0 0.0
    %800 = vmatpush2.xpose.msra.mxu0 0.0
    %801 = vmatprep.subr.mxu0 0.0
    %802 = vmatpush2.xpose.msra.mxu0 0.0
    %803 = vmatprep.subr.mxu0 0.0
    %804 = vmatpush2.xpose.msra.mxu0 0.0
    %805 = vmatprep.subr.mxu0 0.0
    %806 = vmatpush2.xpose.msra.mxu0 0.0
    %807 = vmatprep.mubr.f32.mxu0 0.0
    %808 = vmatmul.mubr.f32.gmra.mxu0 %v735
    %v809 = vpop.f32.mrf.mxu0
    %v810 = vadd.f32 %v145, %v809
    %v811 = vpop.f32.mrf.mxu0
    %812 = vmatprep.mubr.f32.mxu0 0.0
    %813 = vmatmul.mubr.f32.gmra.mxu0 %v737
    %v814 = vpop.f32.mrf.mxu0
    %v815 = vadd.f32 %v146, %v814
    %v816 = vpop.f32.mrf.mxu0
    %817 = vdwg.mxu0
    %v818 = vsel %vm243, %v810, -inf
    %819 = vmax.xlane.f32.xlu0 %v818
    %v820 = vpop.xlane.xlu0 %819
    %v821 = vsel %vm243, %v815, -inf
    %822 = vmax.xlane.f32.xlu0 %v821
    %v823 = vpop.xlane.xlu0 %822
    %v824 = vsub.f32 %v810, %v820
    %v825 = vsub.f32 %v815, %v823
    %v826 = vmul.f32 %v824, 1.442695
    %v827 = vpow.pop %v826
    %v828 = vmul.f32 %v825, 1.442695
    %v829 = vpow.pop %v828
    %v830 = vsel %vm243, %v827, 0.0
    %831 = vadd.xlane.f32.xlu0 %v830
    %v832 = vpop.xlane.xlu0 %831
    %v833 = vsel %vm243, %v829, 0.0
    %834 = vadd.xlane.f32.xlu0 %v833
    %v835 = vpop.xlane.xlu0 %834
    %836 = vrot.lane.b32.xlu0 %v128, 48
    %v837 = vpop.permute.xlu0 %836
    %838 = vrot.lane.b32.xlu0 %v133, 48
    %v839 = vpop.permute.xlu0 %838
    %v843 = vsel %vm243, %v827, 0
    %v846 = vsel %vm243, %v829, 0
    %848 = vmatprep.subr.mxu0 0.0
    %849 = vmatpush1.msra.mxu0 0.0
    %850 = vmatprep.subr.mxu0 0.0
    %851 = vmatpush1.msra.mxu0 0.0
    %852 = vmatprep.subr.mxu0 0.0
    %853 = vmatpush1.msra.mxu0 0.0
    %854 = vmatprep.subr.mxu0 0.0
    %855 = vmatpush1.msra.mxu0 0.0
    %856 = vmatprep.subr.mxu0 0.0
    %857 = vmatpush1.msra.mxu0 0.0
    %858 = vmatprep.subr.mxu0 0.0
    %859 = vmatpush1.msra.mxu0 0.0
    %860 = vmatprep.subr.mxu0 0.0
    %861 = vmatpush1.msra.mxu0 0.0
    %862 = vmatprep.subr.mxu0 0.0
    %863 = vmatpush1.msra.mxu0 0.0
    %864 = vmatprep.subr.mxu0 0.0
    %865 = vmatpush1.msra.mxu0 0.0
    %866 = vmatprep.subr.mxu0 0.0
    %867 = vmatpush1.msra.mxu0 0.0
    %868 = vmatprep.subr.mxu0 0.0
    %869 = vmatpush1.msra.mxu0 0.0
    %870 = vmatprep.subr.mxu0 0.0
    %871 = vmatpush1.msra.mxu0 0.0
    %872 = vmatprep.subr.mxu0 0.0
    %873 = vmatpush1.msra.mxu0 0.0
    %874 = vmatprep.subr.mxu0 0.0
    %875 = vmatpush1.msra.mxu0 0.0
    %876 = vmatprep.subr.mxu0 0.0
    %877 = vmatpush1.msra.mxu0 %v839
    %878 = vmatprep.subr.mxu0 0.0
    %879 = vmatpush1.msra.mxu0 %v837
    %880 = vmatprep.subr.mxu0 0.0
    %881 = vmatpush2.msra.mxu0 0.0
    %882 = vmatprep.subr.mxu0 0.0
    %883 = vmatpush2.msra.mxu0 0.0
    %884 = vmatprep.subr.mxu0 0.0
    %885 = vmatpush2.msra.mxu0 0.0
    %886 = vmatprep.subr.mxu0 0.0
    %887 = vmatpush2.msra.mxu0 0.0
    %888 = vmatprep.subr.mxu0 0.0
    %889 = vmatpush2.msra.mxu0 0.0
    %890 = vmatprep.subr.mxu0 0.0
    %891 = vmatpush2.msra.mxu0 0.0
    %892 = vmatprep.subr.mxu0 0.0
    %893 = vmatpush2.msra.mxu0 0.0
    %894 = vmatprep.subr.mxu0 0.0
    %895 = vmatpush2.msra.mxu0 0.0
    %896 = vmatprep.subr.mxu0 0.0
    %897 = vmatpush2.msra.mxu0 0.0
    %898 = vmatprep.subr.mxu0 0.0
    %899 = vmatpush2.msra.mxu0 0.0
    %900 = vmatprep.subr.mxu0 0.0
    %901 = vmatpush2.msra.mxu0 0.0
    %902 = vmatprep.subr.mxu0 0.0
    %903 = vmatpush2.msra.mxu0 0.0
    %904 = vmatprep.subr.mxu0 0.0
    %905 = vmatpush2.msra.mxu0 0.0
    %906 = vmatprep.subr.mxu0 0.0
    %907 = vmatpush2.msra.mxu0 0.0
    %908 = vmatprep.subr.mxu0 0.0
    %909 = vmatpush2.msra.mxu0 0.0
    %910 = vmatprep.subr.mxu0 0.0
    %911 = vmatpush2.msra.mxu0 0.0
    %912 = vmatprep.mubr.f32.mxu0 0.0
    %913 = vmatmul.mubr.f32.gmra.mxu0 %v843
    %v914 = vpop.f32.mrf.mxu0
    %v915 = vadd.f32 0.0, %v914
    %v916 = vpop.f32.mrf.mxu0
    %917 = vmatprep.mubr.f32.mxu0 0.0
    %918 = vmatmul.mubr.f32.gmra.mxu0 %v846
    %v919 = vpop.f32.mrf.mxu0
    %v920 = vadd.f32 0.0, %v919
    %v921 = vpop.f32.mrf.mxu0
    %922 = vdwg.mxu0
    %v923 = vrcp.pop %v832
    %v924 = vrcp.pop %v835
    %v925 = vmul.f32 %v915, %v923
    %v926 = vmul.f32 %v920, %v924
    %928 = vrot.lane.b32.xlu0 %v47, 32
    %v929 = vpop.permute.xlu0 %928
    %v932 = vsel %vm159, %v925, 0
    %v935 = vsel %vm159, %v926, 0
    %937 = vmatprep.subr.mxu0 0.0
    %938 = vmatpush1.msra.mxu0 0.0
    %939 = vmatprep.subr.mxu0 0.0
    %940 = vmatpush1.msra.mxu0 0.0
    %941 = vmatprep.subr.mxu0 0.0
    %942 = vmatpush1.msra.mxu0 0.0
    %943 = vmatprep.subr.mxu0 0.0
    %944 = vmatpush1.msra.mxu0 0.0
    %945 = vmatprep.subr.mxu0 0.0
    %946 = vmatpush1.msra.mxu0 0.0
    %947 = vmatprep.subr.mxu0 0.0
    %948 = vmatpush1.msra.mxu0 0.0
    %949 = vmatprep.subr.mxu0 0.0
    %950 = vmatpush1.msra.mxu0 0.0
    %951 = vmatprep.subr.mxu0 0.0
    %952 = vmatpush1.msra.mxu0 0.0
    %953 = vmatprep.subr.mxu0 0.0
    %954 = vmatpush1.msra.mxu0 0.0
    %955 = vmatprep.subr.mxu0 0.0
    %956 = vmatpush1.msra.mxu0 0.0
    %957 = vmatprep.subr.mxu0 0.0
    %958 = vmatpush1.msra.mxu0 0.0
    %959 = vmatprep.subr.mxu0 0.0
    %960 = vmatpush1.msra.mxu0 0.0
    %961 = vmatprep.subr.mxu0 0.0
    %962 = vmatpush1.msra.mxu0 0.0
    %963 = vmatprep.subr.mxu0 0.0
    %964 = vmatpush1.msra.mxu0 0.0
    %965 = vmatprep.subr.mxu0 0.0
    %966 = vmatpush1.msra.mxu0 0.0
    %967 = vmatprep.subr.mxu0 0.0
    %968 = vmatpush1.msra.mxu0 %v929
    %969 = vmatprep.subr.mxu0 0.0
    %970 = vmatpush2.msra.mxu0 0.0
    %971 = vmatprep.subr.mxu0 0.0
    %972 = vmatpush2.msra.mxu0 0.0
    %973 = vmatprep.subr.mxu0 0.0
    %974 = vmatpush2.msra.mxu0 0.0
    %975 = vmatprep.subr.mxu0 0.0
    %976 = vmatpush2.msra.mxu0 0.0
    %977 = vmatprep.subr.mxu0 0.0
    %978 = vmatpush2.msra.mxu0 0.0
    %979 = vmatprep.subr.mxu0 0.0
    %980 = vmatpush2.msra.mxu0 0.0
    %981 = vmatprep.subr.mxu0 0.0
    %982 = vmatpush2.msra.mxu0 0.0
    %983 = vmatprep.subr.mxu0 0.0
    %984 = vmatpush2.msra.mxu0 0.0
    %985 = vmatprep.subr.mxu0 0.0
    %986 = vmatpush2.msra.mxu0 0.0
    %987 = vmatprep.subr.mxu0 0.0
    %988 = vmatpush2.msra.mxu0 0.0
    %989 = vmatprep.subr.mxu0 0.0
    %990 = vmatpush2.msra.mxu0 0.0
    %991 = vmatprep.subr.mxu0 0.0
    %992 = vmatpush2.msra.mxu0 0.0
    %993 = vmatprep.subr.mxu0 0.0
    %994 = vmatpush2.msra.mxu0 0.0
    %995 = vmatprep.subr.mxu0 0.0
    %996 = vmatpush2.msra.mxu0 0.0
    %997 = vmatprep.subr.mxu0 0.0
    %998 = vmatpush2.msra.mxu0 0.0
    %999 = vmatprep.subr.mxu0 0.0
    %1000 = vmatpush2.msra.mxu0 0.0
    %1001 = vmatprep.mubr.f32.mxu0 0.0
    %1002 = vmatmul.mubr.f32.gmra.mxu0 %v932
    %v1003 = vpop.f32.mrf.mxu0
    %v1004 = vadd.f32 0.0, %v1003
    %v1005 = vpop.f32.mrf.mxu0
    %1006 = vmatprep.mubr.f32.mxu0 0.0
    %1007 = vmatmul.mubr.f32.gmra.mxu0 %v935
    %v1008 = vpop.f32.mrf.mxu0
    %v1009 = vadd.f32 0.0, %v1008
    %v1010 = vpop.f32.mrf.mxu0
    %1011 = vdwg.mxu0
    %v1012 = vadd.f32 %v725, %v1004
    %v1013 = vadd.f32 %v726, %v1009
    %1014 = vrot.lane.b32.xlu0 %v128, 104
    %v1015 = vpop.permute.xlu0 %1014
    %1016 = vrot.lane.b32.xlu0 %v133, 104
    %v1017 = vpop.permute.xlu0 %1016
    %1018 = vrot.lane.b32.xlu0 %v128, 72
    %v1019 = vpop.permute.xlu0 %1018
    %1020 = vrot.lane.b32.xlu0 %v133, 72
    %v1021 = vpop.permute.xlu0 %1020
    %v1022 = vsel %vm159, %v1015, 0
    %v1024 = vsel %vm159, %v1017, 0
    %v1026 = vsel %vm159, %v1019, 0
    %v1028 = vsel %vm159, %v1021, 0
    %1030 = vmatprep.subr.mxu0 0.0
    %1031 = vmatpush1.xpose.msra.mxu0 0.0
    %1032 = vmatprep.subr.mxu0 0.0
    %1033 = vmatpush1.xpose.msra.mxu0 0.0
    %1034 = vmatprep.subr.mxu0 0.0
    %1035 = vmatpush1.xpose.msra.mxu0 0.0
    %1036 = vmatprep.subr.mxu0 0.0
    %1037 = vmatpush1.xpose.msra.mxu0 0.0
    %1038 = vmatprep.subr.mxu0 0.0
    %1039 = vmatpush1.xpose.msra.mxu0 0.0
    %1040 = vmatprep.subr.mxu0 0.0
    %1041 = vmatpush1.xpose.msra.mxu0 0.0
    %1042 = vmatprep.subr.mxu0 0.0
    %1043 = vmatpush1.xpose.msra.mxu0 0.0
    %1044 = vmatprep.subr.mxu0 0.0
    %1045 = vmatpush1.xpose.msra.mxu0 0.0
    %1046 = vmatprep.subr.mxu0 0.0
    %1047 = vmatpush1.xpose.msra.mxu0 0.0
    %1048 = vmatprep.subr.mxu0 0.0
    %1049 = vmatpush1.xpose.msra.mxu0 0.0
    %1050 = vmatprep.subr.mxu0 0.0
    %1051 = vmatpush1.xpose.msra.mxu0 0.0
    %1052 = vmatprep.subr.mxu0 0.0
    %1053 = vmatpush1.xpose.msra.mxu0 0.0
    %1054 = vmatprep.subr.mxu0 0.0
    %1055 = vmatpush1.xpose.msra.mxu0 0.0
    %1056 = vmatprep.subr.mxu0 0.0
    %1057 = vmatpush1.xpose.msra.mxu0 0.0
    %1058 = vmatprep.subr.mxu0 0.0
    %1059 = vmatpush1.xpose.msra.mxu0 %v1028
    %1060 = vmatprep.subr.mxu0 0.0
    %1061 = vmatpush1.xpose.msra.mxu0 %v1026
    %1062 = vmatprep.subr.mxu0 0.0
    %1063 = vmatpush2.xpose.msra.mxu0 0.0
    %1064 = vmatprep.subr.mxu0 0.0
    %1065 = vmatpush2.xpose.msra.mxu0 0.0
    %1066 = vmatprep.subr.mxu0 0.0
    %1067 = vmatpush2.xpose.msra.mxu0 0.0
    %1068 = vmatprep.subr.mxu0 0.0
    %1069 = vmatpush2.xpose.msra.mxu0 0.0
    %1070 = vmatprep.subr.mxu0 0.0
    %1071 = vmatpush2.xpose.msra.mxu0 0.0
    %1072 = vmatprep.subr.mxu0 0.0
    %1073 = vmatpush2.xpose.msra.mxu0 0.0
    %1074 = vmatprep.subr.mxu0 0.0
    %1075 = vmatpush2.xpose.msra.mxu0 0.0
    %1076 = vmatprep.subr.mxu0 0.0
    %1077 = vmatpush2.xpose.msra.mxu0 0.0
    %1078 = vmatprep.subr.mxu0 0.0
    %1079 = vmatpush2.xpose.msra.mxu0 0.0
    %1080 = vmatprep.subr.mxu0 0.0
    %1081 = vmatpush2.xpose.msra.mxu0 0.0
    %1082 = vmatprep.subr.mxu0 0.0
    %1083 = vmatpush2.xpose.msra.mxu0 0.0
    %1084 = vmatprep.subr.mxu0 0.0
    %1085 = vmatpush2.xpose.msra.mxu0 0.0
    %1086 = vmatprep.subr.mxu0 0.0
    %1087 = vmatpush2.xpose.msra.mxu0 0.0
    %1088 = vmatprep.subr.mxu0 0.0
    %1089 = vmatpush2.xpose.msra.mxu0 0.0
    %1090 = vmatprep.subr.mxu0 0.0
    %1091 = vmatpush2.xpose.msra.mxu0 0.0
    %1092 = vmatprep.subr.mxu0 0.0
    %1093 = vmatpush2.xpose.msra.mxu0 0.0
    %1094 = vmatprep.mubr.f32.mxu0 0.0
    %1095 = vmatmul.mubr.f32.gmra.mxu0 %v1022
    %v1096 = vpop.f32.mrf.mxu0
    %v1097 = vadd.f32 %v145, %v1096
    %v1098 = vpop.f32.mrf.mxu0
    %1099 = vmatprep.mubr.f32.mxu0 0.0
    %1100 = vmatmul.mubr.f32.gmra.mxu0 %v1024
    %v1101 = vpop.f32.mrf.mxu0
    %v1102 = vadd.f32 %v146, %v1101
    %v1103 = vpop.f32.mrf.mxu0
    %1104 = vdwg.mxu0
    %v1105 = vsel %vm243, %v1097, -inf
    %1106 = vmax.xlane.f32.xlu0 %v1105
    %v1107 = vpop.xlane.xlu0 %1106
    %v1108 = vsel %vm243, %v1102, -inf
    %1109 = vmax.xlane.f32.xlu0 %v1108
    %v1110 = vpop.xlane.xlu0 %1109
    %v1111 = vsub.f32 %v1097, %v1107
    %v1112 = vsub.f32 %v1102, %v1110
    %v1113 = vmul.f32 %v1111, 1.442695
    %v1114 = vpow.pop %v1113
    %v1115 = vmul.f32 %v1112, 1.442695
    %v1116 = vpow.pop %v1115
    %v1117 = vsel %vm243, %v1114, 0.0
    %1118 = vadd.xlane.f32.xlu0 %v1117
    %v1119 = vpop.xlane.xlu0 %1118
    %v1120 = vsel %vm243, %v1116, 0.0
    %1121 = vadd.xlane.f32.xlu0 %v1120
    %v1122 = vpop.xlane.xlu0 %1121
    %1123 = vrot.lane.b32.xlu0 %v128, 40
    %v1124 = vpop.permute.xlu0 %1123
    %1125 = vrot.lane.b32.xlu0 %v133, 40
    %v1126 = vpop.permute.xlu0 %1125
    %v1130 = vsel %vm243, %v1114, 0
    %v1133 = vsel %vm243, %v1116, 0
    %1135 = vmatprep.subr.mxu0 0.0
    %1136 = vmatpush1.msra.mxu0 0.0
    %1137 = vmatprep.subr.mxu0 0.0
    %1138 = vmatpush1.msra.mxu0 0.0
    %1139 = vmatprep.subr.mxu0 0.0
    %1140 = vmatpush1.msra.mxu0 0.0
    %1141 = vmatprep.subr.mxu0 0.0
    %1142 = vmatpush1.msra.mxu0 0.0
    %1143 = vmatprep.subr.mxu0 0.0
    %1144 = vmatpush1.msra.mxu0 0.0
    %1145 = vmatprep.subr.mxu0 0.0
    %1146 = vmatpush1.msra.mxu0 0.0
    %1147 = vmatprep.subr.mxu0 0.0
    %1148 = vmatpush1.msra.mxu0 0.0
    %1149 = vmatprep.subr.mxu0 0.0
    %1150 = vmatpush1.msra.mxu0 0.0
    %1151 = vmatprep.subr.mxu0 0.0
    %1152 = vmatpush1.msra.mxu0 0.0
    %1153 = vmatprep.subr.mxu0 0.0
    %1154 = vmatpush1.msra.mxu0 0.0
    %1155 = vmatprep.subr.mxu0 0.0
    %1156 = vmatpush1.msra.mxu0 0.0
    %1157 = vmatprep.subr.mxu0 0.0
    %1158 = vmatpush1.msra.mxu0 0.0
    %1159 = vmatprep.subr.mxu0 0.0
    %1160 = vmatpush1.msra.mxu0 0.0
    %1161 = vmatprep.subr.mxu0 0.0
    %1162 = vmatpush1.msra.mxu0 0.0
    %1163 = vmatprep.subr.mxu0 0.0
    %1164 = vmatpush1.msra.mxu0 %v1126
    %1165 = vmatprep.subr.mxu0 0.0
    %1166 = vmatpush1.msra.mxu0 %v1124
    %1167 = vmatprep.subr.mxu0 0.0
    %1168 = vmatpush2.msra.mxu0 0.0
    %1169 = vmatprep.subr.mxu0 0.0
    %1170 = vmatpush2.msra.mxu0 0.0
    %1171 = vmatprep.subr.mxu0 0.0
    %1172 = vmatpush2.msra.mxu0 0.0
    %1173 = vmatprep.subr.mxu0 0.0
    %1174 = vmatpush2.msra.mxu0 0.0
    %1175 = vmatprep.subr.mxu0 0.0
    %1176 = vmatpush2.msra.mxu0 0.0
    %1177 = vmatprep.subr.mxu0 0.0
    %1178 = vmatpush2.msra.mxu0 0.0
    %1179 = vmatprep.subr.mxu0 0.0
    %1180 = vmatpush2.msra.mxu0 0.0
    %1181 = vmatprep.subr.mxu0 0.0
    %1182 = vmatpush2.msra.mxu0 0.0
    %1183 = vmatprep.subr.mxu0 0.0
    %1184 = vmatpush2.msra.mxu0 0.0
    %1185 = vmatprep.subr.mxu0 0.0
    %1186 = vmatpush2.msra.mxu0 0.0
    %1187 = vmatprep.subr.mxu0 0.0
    %1188 = vmatpush2.msra.mxu0 0.0
    %1189 = vmatprep.subr.mxu0 0.0
    %1190 = vmatpush2.msra.mxu0 0.0
    %1191 = vmatprep.subr.mxu0 0.0
    %1192 = vmatpush2.msra.mxu0 0.0
    %1193 = vmatprep.subr.mxu0 0.0
    %1194 = vmatpush2.msra.mxu0 0.0
    %1195 = vmatprep.subr.mxu0 0.0
    %1196 = vmatpush2.msra.mxu0 0.0
    %1197 = vmatprep.subr.mxu0 0.0
    %1198 = vmatpush2.msra.mxu0 0.0
    %1199 = vmatprep.mubr.f32.mxu0 0.0
    %1200 = vmatmul.mubr.f32.gmra.mxu0 %v1130
    %v1201 = vpop.f32.mrf.mxu0
    %v1202 = vadd.f32 0.0, %v1201
    %v1203 = vpop.f32.mrf.mxu0
    %1204 = vmatprep.mubr.f32.mxu0 0.0
    %1205 = vmatmul.mubr.f32.gmra.mxu0 %v1133
    %v1206 = vpop.f32.mrf.mxu0
    %v1207 = vadd.f32 0.0, %v1206
    %v1208 = vpop.f32.mrf.mxu0
    %1209 = vdwg.mxu0
    %v1210 = vrcp.pop %v1119
    %v1211 = vrcp.pop %v1122
    %v1212 = vmul.f32 %v1202, %v1210
    %v1213 = vmul.f32 %v1207, %v1211
    %1215 = vrot.lane.b32.xlu0 %v48, 32
    %v1216 = vpop.permute.xlu0 %1215
    %v1219 = vsel %vm159, %v1212, 0
    %v1222 = vsel %vm159, %v1213, 0
    %1224 = vmatprep.subr.mxu0 0.0
    %1225 = vmatpush1.msra.mxu0 0.0
    %1226 = vmatprep.subr.mxu0 0.0
    %1227 = vmatpush1.msra.mxu0 0.0
    %1228 = vmatprep.subr.mxu0 0.0
    %1229 = vmatpush1.msra.mxu0 0.0
    %1230 = vmatprep.subr.mxu0 0.0
    %1231 = vmatpush1.msra.mxu0 0.0
    %1232 = vmatprep.subr.mxu0 0.0
    %1233 = vmatpush1.msra.mxu0 0.0
    %1234 = vmatprep.subr.mxu0 0.0
    %1235 = vmatpush1.msra.mxu0 0.0
    %1236 = vmatprep.subr.mxu0 0.0
    %1237 = vmatpush1.msra.mxu0 0.0
    %1238 = vmatprep.subr.mxu0 0.0
    %1239 = vmatpush1.msra.mxu0 0.0
    %1240 = vmatprep.subr.mxu0 0.0
    %1241 = vmatpush1.msra.mxu0 0.0
    %1242 = vmatprep.subr.mxu0 0.0
    %1243 = vmatpush1.msra.mxu0 0.0
    %1244 = vmatprep.subr.mxu0 0.0
    %1245 = vmatpush1.msra.mxu0 0.0
    %1246 = vmatprep.subr.mxu0 0.0
    %1247 = vmatpush1.msra.mxu0 0.0
    %1248 = vmatprep.subr.mxu0 0.0
    %1249 = vmatpush1.msra.mxu0 0.0
    %1250 = vmatprep.subr.mxu0 0.0
    %1251 = vmatpush1.msra.mxu0 0.0
    %1252 = vmatprep.subr.mxu0 0.0
    %1253 = vmatpush1.msra.mxu0 0.0
    %1254 = vmatprep.subr.mxu0 0.0
    %1255 = vmatpush1.msra.mxu0 %v1216
    %1256 = vmatprep.subr.mxu0 0.0
    %1257 = vmatpush2.msra.mxu0 0.0
    %1258 = vmatprep.subr.mxu0 0.0
    %1259 = vmatpush2.msra.mxu0 0.0
    %1260 = vmatprep.subr.mxu0 0.0
    %1261 = vmatpush2.msra.mxu0 0.0
    %1262 = vmatprep.subr.mxu0 0.0
    %1263 = vmatpush2.msra.mxu0 0.0
    %1264 = vmatprep.subr.mxu0 0.0
    %1265 = vmatpush2.msra.mxu0 0.0
    %1266 = vmatprep.subr.mxu0 0.0
    %1267 = vmatpush2.msra.mxu0 0.0
    %1268 = vmatprep.subr.mxu0 0.0
    %1269 = vmatpush2.msra.mxu0 0.0
    %1270 = vmatprep.subr.mxu0 0.0
    %1271 = vmatpush2.msra.mxu0 0.0
    %1272 = vmatprep.subr.mxu0 0.0
    %1273 = vmatpush2.msra.mxu0 0.0
    %1274 = vmatprep.subr.mxu0 0.0
    %1275 = vmatpush2.msra.mxu0 0.0
    %1276 = vmatprep.subr.mxu0 0.0
    %1277 = vmatpush2.msra.mxu0 0.0
    %1278 = vmatprep.subr.mxu0 0.0
    %1279 = vmatpush2.msra.mxu0 0.0
    %1280 = vmatprep.subr.mxu0 0.0
    %1281 = vmatpush2.msra.mxu0 0.0
    %1282 = vmatprep.subr.mxu0 0.0
    %1283 = vmatpush2.msra.mxu0 0.0
    %1284 = vmatprep.subr.mxu0 0.0
    %1285 = vmatpush2.msra.mxu0 0.0
    %1286 = vmatprep.subr.mxu0 0.0
    %1287 = vmatpush2.msra.mxu0 0.0
    %1288 = vmatprep.mubr.f32.mxu0 0.0
    %1289 = vmatmul.mubr.f32.gmra.mxu0 %v1219
    %v1290 = vpop.f32.mrf.mxu0
    %v1291 = vadd.f32 0.0, %v1290
    %v1292 = vpop.f32.mrf.mxu0
    %1293 = vmatprep.mubr.f32.mxu0 0.0
    %1294 = vmatmul.mubr.f32.gmra.mxu0 %v1222
    %v1295 = vpop.f32.mrf.mxu0
    %v1296 = vadd.f32 0.0, %v1295
    %v1297 = vpop.f32.mrf.mxu0
    %1298 = vdwg.mxu0
    %v1299 = vadd.f32 %v1012, %v1291
    %v1300 = vadd.f32 %v1013, %v1296
    %v1301 = vsel %vm54, %v1299, 0.0
    %1302 = vadd.xlane.f32.xlu0 %v1301
    %v1303 = vpop.xlane.xlu0 %1302
    %v1304 = vsel %vm54, %v1300, 0.0
    %1305 = vadd.xlane.f32.xlu0 %v1304
    %v1306 = vpop.xlane.xlu0 %1305
    %v1307 = vrcp.pop 32.0
    %v1308 = vmul.f32 %v1303, %v1307
    %v1309 = vmul.f32 %v1306, %v1307
    %v1310 = vsub.f32 %v1299, %v1308
    %v1311 = vsub.f32 %v1300, %v1309
    %v1312 = vmul.f32 %v1310, %v1310
    %v1313 = vmul.f32 %v1311, %v1311
    %v1314 = vsel %vm54, %v1312, 0.0
    %1315 = vadd.xlane.f32.xlu0 %v1314
    %v1316 = vpop.xlane.xlu0 %1315
    %v1317 = vsel %vm54, %v1313, 0.0
    %1318 = vadd.xlane.f32.xlu0 %v1317
    %v1319 = vpop.xlane.xlu0 %1318
    %v1320 = vmul.f32 %v1316, %v1307
    %v1321 = vmul.f32 %v1319, %v1307
    %v1322 = vadd.f32 %v1320, 1e-12
    %v1323 = vadd.f32 %v1321, 1e-12
    %v1324 = vrsqrt.pop %v1322
    %v1325 = vrsqrt.pop %v1323
    %v1326 = vmul.f32 %v1310, %v1324
    %v1327 = vmul.f32 %v1311, %v1325
    %v1328 = vlaneseq
    %v1329 = vshrl.u32 %v1328, 7
    %v1330 = vsub.s32 1, %v1329
    %v1331 = vrot.slane %v49, %v1330
    %v1332 = vmul.f32 %v1326, %v1331
    %v1333 = vmul.f32 %v1327, %v1331
    %1335 = vrot.lane.b32.xlu0 %v1331, 96
    %v1336 = vpop.permute.xlu0 %1335
    %v1338 = vadd.f32 %v1332, %v1336
    %v1339 = vadd.f32 %v1333, %v1336
    %1340 = vst.msk [vmem:[#allocation7] sm:$0xff] %vm54, %v1338
    %1341 = vst.msk [vmem:[#allocation7 + $0x8] sm:$0xff] %vm54, %v1339
    // Predicated region
    $region22: #{iqm_attention.1} parent=1 // pred_check
      _
    $region23: #{iqm_attention.1} parent=1 // pred_check_branch
      %1343 = sbr.rel (0) target = $region25
    $region24: #{iqm_attention.1} parent=1 // pred_region
      %s1345 = ssub.s32 256, 256
      %1346 = vsyncadd [#allocation4], %s1345
      %s1347 = sshll.u32 [#allocation7], 4
      %s1348 = int_to_ptr.vmem [resolvable:$true] %s1347
      %1353 = dma.vmem_to_hbm [thread:$0]  %s1348, 256, %s3, [#allocation4], 128, 128, 8
    $region25: #{iqm_attention.1} parent=1 // pred_fallthru
      _
    // Predicated region
    $region26: #{iqm_attention.1} parent=1 // pred_check
      _
    $region27: #{iqm_attention.1} parent=1 // pred_check_branch
      %1355 = sbr.rel (0) target = $region29
    $region28: #{iqm_attention.1} parent=1 // pred_region
      %1356 = dma.done [#allocation4], 256
    $region29: #{iqm_attention.1} parent=1 // pred_fallthru
      _
    %1357 = vsyncpa [#allocation3], 1
    %1358 = vsyncpa [#allocation6], 1
    %1359 = vsyncpa [#allocation4], 1

</llo_original>
